<compile_context>
chip_gen: v7x
topology: tpu7x:2x2x1
jax: 0.10.0
libtpu: 0.0.40
codegen_flags: <defaults>
</compile_context>

<pallas_src>
import functools

import jax
import jax.numpy as jnp
import numpy as np
from jax.experimental import pallas as pl
from jax.experimental.pallas import tpu as pltpu

KSIZE = 7
PAD = 3


def _round_up(x, m):
    return (x + m - 1) // m * m


def cbam_kernel(x_ref, w1_ref, w2_ref, tconv_ref, bias_ref, o_ref, pad_ref, *,
                height, width, lanes_pad):
    # x_ref / o_ref : (B, C, H*W)      VMEM, io dtype (lane axis = H*W)
    # w1_ref        : (C, Chid_pad)    VMEM f32 (transposed, zero-padded 1x1 conv #1)
    # w2_ref        : (Chid_pad, C)    VMEM f32 (transposed, zero-padded 1x1 conv #2)
    # tconv_ref     : (7*L, W)         VMEM f32 banded 7x7-conv weights (K-stacked)
    # bias_ref      : (1,)             SMEM spatial-conv bias
    # pad_ref       : (B, H+6, L)      VMEM f32 scratch: [mean | max | 0] maps
    B, C, HW = x_ref.shape
    H, W = height, width
    L = lanes_pad
    Hp = H + 2 * PAD

    x = x_ref[...].astype(jnp.float32)

    # ---- channel attention -------------------------------------------------
    avg = jnp.sum(x, axis=2) * jnp.float32(1.0 / HW)          # (B, C) lane reduce
    mx = jnp.max(x, axis=2)                                   # (B, C)
    pooled = jnp.concatenate([avg, mx], axis=0)               # (2B, C): one MLP pass
    hid = jnp.maximum(
        jnp.dot(pooled, w1_ref[...], preferred_element_type=jnp.float32), 0.0)
    mlp = jnp.dot(hid, w2_ref[...], preferred_element_type=jnp.float32)
    ca = jax.nn.sigmoid(mlp[:B] + mlp[B:])                    # (B, C)

    out1 = x * ca[:, :, None]                                 # (B, C, HW) f32
    # Stage out1 through the output buffer (no extra full-size VMEM temp).
    o_ref[...] = out1.astype(o_ref.dtype)

    # ---- spatial attention ---------------------------------------------------
    mean_map = (jnp.sum(out1, axis=1) * jnp.float32(1.0 / C)).reshape(B, H, W)
    max_map = jnp.max(out1, axis=1).reshape(B, H, W)

    # Padded two-channel slab: mean at lanes [0, W), max at [W, 2W), zeros in
    # the lane tail.  Only the 2*PAD border rows need explicit zeroing; the
    # interior rows (and their lane tail) are fully overwritten every step, so
    # this stays correct regardless of which core runs which grid step.
    zero_rows = jnp.zeros((B, PAD, L), jnp.float32)
    pad_ref[:, :PAD, :] = zero_rows
    pad_ref[:, PAD + H:Hp, :] = zero_rows
    parts = [mean_map, max_map]
    if L > 2 * W:
        parts.append(jnp.zeros((B, H, L - 2 * W), jnp.float32))
    pad_ref[:, PAD:PAD + H, :] = jnp.concatenate(parts, axis=-1)

    # 7x7 conv = ONE MXU matmul: im2col over the row offset dy (K = 7*L).
    rows = jnp.concatenate(
        [pad_ref[:, dy:dy + H, :] for dy in range(KSIZE)], axis=-1)  # (B, H, 7L)
    acc = jnp.dot(rows.reshape(B * H, KSIZE * L), tconv_ref[...],
                  preferred_element_type=jnp.float32).reshape(B, H, W)
    sa = jax.nn.sigmoid(acc + bias_ref[0]).reshape(B, 1, HW)

    o_ref[...] = (o_ref[...].astype(jnp.float32) * sa).astype(o_ref.dtype)


def _banded_conv_weights(wsp, width, lanes_pad):
    """(1,2,7,7) conv weight -> (7*L, W) K-stacked banded matrices.

    For lane p = c*W + x of the (unpadded-width) mean|max scratch row h+dy:
      tconv[dy*L + p, q] = wsp[0, c, dy, p - q + PAD]   if |p - q| <= PAD else 0
    so  im2col_rows @ tconv  reproduces the zero-padded 7x7 cross-correlation
    (W-axis padding is folded into the band; H-axis padding lives in the
    zeroed border rows of the scratch).
    """
    W, L = width, lanes_pad
    w = jnp.asarray(wsp, jnp.float32).reshape(2, KSIZE, KSIZE)
    p = jnp.arange(W)[:, None]                      # input column
    q = jnp.arange(W)[None, :]                      # output column
    dx = p - q + PAD
    valid = ((dx >= 0) & (dx < KSIZE)).astype(jnp.float32)
    dx_c = jnp.clip(dx, 0, KSIZE - 1)
    t = w[:, :, dx_c] * valid[None, None]           # (2, 7, W, W)
    tl = jnp.zeros((KSIZE, L, W), jnp.float32)
    tl = tl.at[:, :W, :].set(t[0])                  # mean channel band
    tl = tl.at[:, W:2 * W, :].set(t[1])             # max channel band
    return tl.reshape(KSIZE * L, W)


def _tpu_budget():
    """Generation-aware VMEM budget / grid policy."""
    kind = ""
    try:
        kind = jax.devices()[0].device_kind.lower()
    except Exception:
        pass
    single_tc_big_vmem = any(s in kind for s in ("v5 lite", "v5e", "v6"))
    if single_tc_big_vmem:
        # v5e / v6e: 1 TensorCore, 128 MiB VMEM -> big blocks, no forced split.
        return dict(target=48 << 20, limit_cap=100 << 20, prefer_even_steps=False)
    # v7x (64 MiB VMEM, 2 TCs) and anything unknown: conservative budget,
    # and an even number of parallel grid steps so both cores stay busy.
    return dict(target=22 << 20, limit_cap=48 << 20, prefer_even_steps=True)


def cbam_pallas(x_nchw, w1, w2, wsp, bsp, block_batch=None):
    """x_nchw: (N,C,H,W) f32/bf16; w1: (Chid,C); w2: (C,Chid); wsp: (1,2,7,7); bsp: (1,)."""
    N, C, H, W = x_nchw.shape
    Chid = w1.shape[0]
    HW = H * W
    Hp = H + 2 * PAD
    L = _round_up(2 * W, 128)                       # lane-padded scratch width
    Chid_pad = _round_up(max(Chid, 1), 128)         # MXU-friendly hidden width

    x_dtype = jnp.dtype(x_nchw.dtype)
    io_dtype = x_dtype if x_dtype in (jnp.dtype(jnp.bfloat16),
                                      jnp.dtype(jnp.float32)) else jnp.dtype(jnp.float32)
    io_bytes = io_dtype.itemsize

    # NCHW consumed natively; (H, W) -> H*W is a contiguous (free) reshape.
    # TODO(synk): if HW is not a multiple of 128 the output stores are masked;
    # a lane-padded x/o layout would need mean/max masking and is not done here.
    x_flat = jnp.asarray(x_nchw, io_dtype).reshape(N, C, HW)

    # Zero-padded MLP weights (padding columns/rows contribute exactly 0).
    w1_k = jnp.zeros((C, Chid_pad), jnp.float32).at[:, :Chid].set(
        jnp.asarray(w1, jnp.float32).T)
    w2_k = jnp.zeros((Chid_pad, C), jnp.float32).at[:Chid, :].set(
        jnp.asarray(w2, jnp.float32).T)
    tconv = _banded_conv_weights(wsp, W, L)          # (7*L, W)
    bias = jnp.asarray(bsp, jnp.float32).reshape(1)

    budget = _tpu_budget()

    # Per-sample VMEM residency: double-buffered in/out pipeline buffers,
    # f32 kernel temps (x + out1), pad scratch, im2col rows, conv temps.
    per_sample = (C * HW * (4 * io_bytes + 8)
                  + 4 * Hp * L
                  + 4 * KSIZE * H * L
                  + 4 * 2 * H * W)
    fixed = 8 * (2 * C * Chid_pad + KSIZE * L * W) + (1 << 20)

    if block_batch is None:
        b = int(max(1, min(N, (budget["target"] - fixed) // max(per_sample, 1))))
        if budget["prefer_even_steps"] and N > 1:
            b = min(b, max(1, N // 2))               # at least 2 grid steps
            cand = b
            while cand > 1 and (N % cand or (N // cand) % 2):
                cand -= 1
            if N % cand == 0 and (N // cand) % 2 == 0:
                b = cand
            else:
                while N % b:
                    b -= 1
        else:
            while N % b:
                b -= 1
        block_batch = b
    B = block_batch
    assert N % B == 0, "block_batch must divide N"
    grid = (N // B,)

    block_bytes = B * per_sample + fixed
    vmem_limit = int(min(budget["limit_cap"],
                         max(16 << 20, block_bytes + (4 << 20))))

    cost = pl.CostEstimate(
        flops=int(N * (8 * C * Chid_pad + 2 * KSIZE * L * H * W + 8 * C * HW)),
        transcendentals=int(N * (C + HW)),
        bytes_accessed=int(2 * N * C * HW * io_bytes),
    )

    kernel = functools.partial(cbam_kernel, height=H, width=W, lanes_pad=L)

    out_flat = pl.pallas_call(
        kernel,
        out_shape=jax.ShapeDtypeStruct((N, C, HW), io_dtype),
        grid_spec=pltpu.PrefetchScalarGridSpec(
            num_scalar_prefetch=0,
            grid=grid,
            in_specs=[
                pl.BlockSpec((B, C, HW), lambda n: (n, 0, 0)),
                pl.BlockSpec((C, Chid_pad), lambda n: (0, 0)),
                pl.BlockSpec((Chid_pad, C), lambda n: (0, 0)),
                pl.BlockSpec((KSIZE * L, W), lambda n: (0, 0)),
                pl.BlockSpec(memory_space=pltpu.MemorySpace.SMEM),
            ],
            out_specs=pl.BlockSpec((B, C, HW), lambda n: (n, 0, 0)),
            scratch_shapes=[pltpu.VMEM((B, Hp, L), jnp.float32)],
        ),
        compiler_params=pltpu.CompilerParams(
            dimension_semantics=("parallel",),
            vmem_limit_bytes=vmem_limit,
        ),
        cost_estimate=cost,
    )(x_flat, w1_k, w2_k, tconv, bias)

    return out_flat.reshape(N, C, H, W)


def cbam_ref(x, w1, w2, wsp, bsp):
    """Pure-JAX f32 reference mirroring the PyTorch NCHW math."""
    N, C, H, W = x.shape
    x = jnp.asarray(x, jnp.float32)
    avg = jnp.mean(x, axis=(2, 3))
    mx = jnp.max(x, axis=(2, 3))

    def mlp(v):
        return jnp.maximum(v @ w1.T, 0.0) @ w2.T

    ca = jax.nn.sigmoid(mlp(avg) + mlp(mx))
    out1 = x * ca[:, :, None, None]

    mean_map = jnp.mean(out1, axis=1)
    max_map = jnp.max(out1, axis=1)
    pm = jnp.pad(mean_map, ((0, 0), (PAD, PAD), (PAD, PAD)))
    px = jnp.pad(max_map, ((0, 0), (PAD, PAD), (PAD, PAD)))
    acc = jnp.full((N, H, W), bsp[0])
    for dy in range(KSIZE):
        for dx in range(KSIZE):
            acc = (acc
                   + wsp[0, 0, dy, dx] * pm[:, dy:dy + H, dx:dx + W]
                   + wsp[0, 1, dy, dx] * px[:, dy:dy + H, dx:dx + W])
    sa = jax.nn.sigmoid(acc)[:, None]
    return out1 * sa


if __name__ == "__main__":
    key = jax.random.PRNGKey(0)
    N, C, H, W = 2, 32, 16, 16
    ratio = 16
    Chid = C // ratio  # 2

    k1, k2, k3, k4, k5 = jax.random.split(key, 5)
    x = jax.random.normal(k1, (N, C, H, W), jnp.float32)
    w1 = jax.random.normal(k2, (Chid, C), jnp.float32) * 0.1   # Conv2d(C, C//r, 1, bias=False)
    w2 = jax.random.normal(k3, (C, Chid), jnp.float32) * 0.1   # Conv2d(C//r, C, 1, bias=False)
    wsp = jax.random.normal(k4, (1, 2, KSIZE, KSIZE), jnp.float32) * 0.1  # Conv2d(2,1,7,pad=3)
    bsp = jax.random.normal(k5, (1,), jnp.float32) * 0.1

    # f32 I/O path.
    out = jax.block_until_ready(cbam_pallas(x, w1, w2, wsp, bsp))
    ref = cbam_ref(x, w1, w2, wsp, bsp)
    np.testing.assert_allclose(np.asarray(out), np.asarray(ref), rtol=2e-3, atol=2e-3)

    # bf16 I/O path (half the HBM traffic; f32 accumulation inside the kernel).
    x_bf = x.astype(jnp.bfloat16)
    out_bf = jax.block_until_ready(cbam_pallas(x_bf, w1, w2, wsp, bsp))
    ref_bf = cbam_ref(x_bf.astype(jnp.float32), w1, w2, wsp, bsp)
    np.testing.assert_allclose(np.asarray(out_bf, dtype=np.float32),
                               np.asarray(ref_bf), rtol=2e-2, atol=2e-2)
    print("KERNEL_OK")
</pallas_src>

<mosaic_0001>
module attributes {stable_mosaic.version = 11 : i64} {
  func.func @cbam_kernel(%arg0: i32, %arg1: memref<1x32x256xf32, #tpu.memory_space<vmem>>, %arg2: memref<32x128xf32, #tpu.memory_space<vmem>>, %arg3: memref<128x32xf32, #tpu.memory_space<vmem>>, %arg4: memref<896x16xf32, #tpu.memory_space<vmem>>, %arg5: memref<1xf32, #tpu.memory_space<smem>>, %arg6: memref<1x32x256xf32, #tpu.memory_space<vmem>>, %arg7: memref<1x22x128xf32, #tpu.memory_space<vmem>>) attributes {dimension_semantics = [#tpu.dimension_semantics<parallel>], iteration_bounds = array<i64: 2>, scalar_prefetch = 0 : i64, scratch_operands = 1 : i64, tpu.core_type = #tpu.core_type<tc>, window_params = [{transform_indices = @transform_0, window_bounds = array<i64: 1, 32, 256>}, {pipeline_mode = #tpu.pipeline_mode<synchronous>, transform_indices = @transform_1, window_bounds = array<i64: 32, 128>}, {pipeline_mode = #tpu.pipeline_mode<synchronous>, transform_indices = @transform_2, window_bounds = array<i64: 128, 32>}, {pipeline_mode = #tpu.pipeline_mode<synchronous>, transform_indices = @transform_3, window_bounds = array<i64: 896, 16>}, {transform_indices = @transform_4, window_bounds = array<i64: 1>}, {transform_indices = @transform_5, window_bounds = array<i64: 1, 32, 256>}]} {
    %c0 = arith.constant 0 : index
    %c0_0 = arith.constant 0 : index
    %c0_1 = arith.constant 0 : index
    %0 = vector.load %arg1[%c0, %c0_0, %c0_1] : memref<1x32x256xf32, #tpu.memory_space<vmem>>, vector<1x32x256xf32>
    %cst = arith.constant dense<0.000000e+00> : vector<1x32xf32>
    %1 = vector.multi_reduction <add>, %0, %cst [2] : vector<1x32x256xf32> to vector<1x32xf32>
    %cst_2 = arith.constant 3.906250e-03 : f32
    %2 = vector.broadcast %cst_2 : f32 to vector<1x32xf32>
    %3 = arith.mulf %1, %2 : vector<1x32xf32>
    %cst_3 = arith.constant dense<0xFF800000> : vector<1x32xf32>
    %4 = vector.multi_reduction <maximumf>, %0, %cst_3 [2] : vector<1x32x256xf32> to vector<1x32xf32>
    %5 = tpu.concatenate %3, %4 in 0 : vector<1x32xf32>, vector<1x32xf32> -> vector<2x32xf32>
    %c0_4 = arith.constant 0 : index
    %c0_5 = arith.constant 0 : index
    %6 = vector.load %arg2[%c0_4, %c0_5] : memref<32x128xf32, #tpu.memory_space<vmem>>, vector<32x128xf32>
    %cst_6 = arith.constant dense<0.000000e+00> : vector<2x128xf32>
    %7 = tpu.matmul %5, %6, %cst_6 {dimension_numbers = #tpu.dot_dimension_numbers<[1], [0], [0], [1], [0, 0, 1, 1], [], []>} : vector<2x32xf32>, vector<32x128xf32>, vector<2x128xf32> -> vector<2x128xf32>
    %cst_7 = arith.constant 0.000000e+00 : f32
    %8 = vector.broadcast %cst_7 : f32 to vector<2x128xf32>
    %9 = arith.maximumf %7, %8 : vector<2x128xf32>
    %c0_8 = arith.constant 0 : index
    %c0_9 = arith.constant 0 : index
    %10 = vector.load %arg3[%c0_8, %c0_9] : memref<128x32xf32, #tpu.memory_space<vmem>>, vector<128x32xf32>
    %cst_10 = arith.constant dense<0.000000e+00> : vector<2x32xf32>
    %11 = tpu.matmul %9, %10, %cst_10 {dimension_numbers = #tpu.dot_dimension_numbers<[1], [0], [0], [1], [0, 0, 1, 1], [], []>} : vector<2x128xf32>, vector<128x32xf32>, vector<2x32xf32> -> vector<2x32xf32>
    %12 = vector.extract_strided_slice %11 {offsets = [0, 0], sizes = [1, 32], strides = [1, 1]} : vector<2x32xf32> to vector<1x32xf32>
    %13 = vector.extract_strided_slice %11 {offsets = [1, 0], sizes = [1, 32], strides = [1, 1]} : vector<2x32xf32> to vector<1x32xf32>
    %14 = arith.addf %12, %13 : vector<1x32xf32>
    %15 = arith.negf %14 : vector<1x32xf32>
    %16 = math.exp %15 : vector<1x32xf32>
    %cst_11 = arith.constant 1.000000e+00 : f32
    %17 = vector.broadcast %cst_11 : f32 to vector<1x32xf32>
    %18 = arith.addf %17, %16 : vector<1x32xf32>
    %19 = arith.divf %17, %18 : vector<1x32xf32>
    %20 = vector.shape_cast %19 : vector<1x32xf32> to vector<1x32x1xf32>
    %21 = vector.broadcast %20 : vector<1x32x1xf32> to vector<1x32x256xf32>
    %22 = arith.mulf %0, %21 : vector<1x32x256xf32>
    %c0_12 = arith.constant 0 : index
    %c0_13 = arith.constant 0 : index
    %c0_14 = arith.constant 0 : index
    %23 = vector.load %arg6[%c0_12, %c0_13, %c0_14] : memref<1x32x256xf32, #tpu.memory_space<vmem>>, vector<1x32x256xf32>
    tpu.vector_store %arg6[%c0_12, %c0_13, %c0_14], %22 {strides = array<i32>} : memref<1x32x256xf32, #tpu.memory_space<vmem>>, vector<1x32x256xf32>,
    %cst_15 = arith.constant dense<0.000000e+00> : vector<1x256xf32>
    %24 = vector.multi_reduction <add>, %22, %cst_15 [1] : vector<1x32x256xf32> to vector<1x256xf32>
    %cst_16 = arith.constant 3.125000e-02 : f32
    %25 = vector.broadcast %cst_16 : f32 to vector<1x256xf32>
    %26 = arith.mulf %24, %25 : vector<1x256xf32>
    %27 = vector.shape_cast %26 : vector<1x256xf32> to vector<1x16x16xf32>
    %cst_17 = arith.constant dense<0xFF800000> : vector<1x256xf32>
    %28 = vector.multi_reduction <maximumf>, %22, %cst_17 [1] : vector<1x32x256xf32> to vector<1x256xf32>
    %29 = vector.shape_cast %28 : vector<1x256xf32> to vector<1x16x16xf32>
    %cst_18 = arith.constant 0.000000e+00 : f32
    %30 = vector.broadcast %cst_18 : f32 to vector<1x3x128xf32>
    %c0_19 = arith.constant 0 : index
    %c0_20 = arith.constant 0 : index
    %c0_21 = arith.constant 0 : index
    %31 = vector.load %arg7[%c0_19, %c0_20, %c0_21] : memref<1x22x128xf32, #tpu.memory_space<vmem>>, vector<1x3x128xf32>
    tpu.vector_store %arg7[%c0_19, %c0_20, %c0_21], %30 {strides = array<i32>} : memref<1x22x128xf32, #tpu.memory_space<vmem>>, vector<1x3x128xf32>,
    %c0_22 = arith.constant 0 : index
    %c19 = arith.constant 19 : index
    %c0_23 = arith.constant 0 : index
    %32 = vector.load %arg7[%c0_22, %c19, %c0_23] : memref<1x22x128xf32, #tpu.memory_space<vmem>>, vector<1x3x128xf32>
    tpu.vector_store %arg7[%c0_22, %c19, %c0_23], %30 {strides = array<i32>} : memref<1x22x128xf32, #tpu.memory_space<vmem>>, vector<1x3x128xf32>,
    %cst_24 = arith.constant 0.000000e+00 : f32
    %33 = vector.broadcast %cst_24 : f32 to vector<1x16x96xf32>
    %34 = tpu.concatenate %27, %29, %33 in 2 : vector<1x16x16xf32>, vector<1x16x16xf32>, vector<1x16x96xf32> -> vector<1x16x128xf32>
    %c0_25 = arith.constant 0 : index
    %c3 = arith.constant 3 : index
    %c0_26 = arith.constant 0 : index
    %35 = vector.load %arg7[%c0_25, %c3, %c0_26] : memref<1x22x128xf32, #tpu.memory_space<vmem>>, vector<1x16x128xf32>
    tpu.vector_store %arg7[%c0_25, %c3, %c0_26], %34 {strides = array<i32>} : memref<1x22x128xf32, #tpu.memory_space<vmem>>, vector<1x16x128xf32>,
    %c0_27 = arith.constant 0 : index
    %c0_28 = arith.constant 0 : index
    %c0_29 = arith.constant 0 : index
    %36 = vector.load %arg7[%c0_27, %c0_28, %c0_29] : memref<1x22x128xf32, #tpu.memory_space<vmem>>, vector<1x16x128xf32>
    %c0_30 = arith.constant 0 : index
    %c1 = arith.constant 1 : index
    %c0_31 = arith.constant 0 : index
    %37 = vector.load %arg7[%c0_30, %c1, %c0_31] : memref<1x22x128xf32, #tpu.memory_space<vmem>>, vector<1x16x128xf32>
    %c0_32 = arith.constant 0 : index
    %c2 = arith.constant 2 : index
    %c0_33 = arith.constant 0 : index
    %38 = vector.load %arg7[%c0_32, %c2, %c0_33] : memref<1x22x128xf32, #tpu.memory_space<vmem>>, vector<1x16x128xf32>
    %c0_34 = arith.constant 0 : index
    %c3_35 = arith.constant 3 : index
    %c0_36 = arith.constant 0 : index
    %39 = vector.load %arg7[%c0_34, %c3_35, %c0_36] : memref<1x22x128xf32, #tpu.memory_space<vmem>>, vector<1x16x128xf32>
    %c0_37 = arith.constant 0 : index
    %c4 = arith.constant 4 : index
    %c0_38 = arith.constant 0 : index
    %40 = vector.load %arg7[%c0_37, %c4, %c0_38] : memref<1x22x128xf32, #tpu.memory_space<vmem>>, vector<1x16x128xf32>
    %c0_39 = arith.constant 0 : index
    %c5 = arith.constant 5 : index
    %c0_40 = arith.constant 0 : index
    %41 = vector.load %arg7[%c0_39, %c5, %c0_40] : memref<1x22x128xf32, #tpu.memory_space<vmem>>, vector<1x16x128xf32>
    %c0_41 = arith.constant 0 : index
    %c6 = arith.constant 6 : index
    %c0_42 = arith.constant 0 : index
    %42 = vector.load %arg7[%c0_41, %c6, %c0_42] : memref<1x22x128xf32, #tpu.memory_space<vmem>>, vector<1x16x128xf32>
    %43 = tpu.concatenate %36, %37, %38, %39, %40, %41, %42 in 2 : vector<1x16x128xf32>, vector<1x16x128xf32>, vector<1x16x128xf32>, vector<1x16x128xf32>, vector<1x16x128xf32>, vector<1x16x128xf32>, vector<1x16x128xf32> -> vector<1x16x896xf32>
    %44 = vector.shape_cast %43 : vector<1x16x896xf32> to vector<16x896xf32>
    %c0_43 = arith.constant 0 : index
    %c0_44 = arith.constant 0 : index
    %45 = vector.load %arg4[%c0_43, %c0_44] : memref<896x16xf32, #tpu.memory_space<vmem>>, vector<896x16xf32>
    %cst_45 = arith.constant dense<0.000000e+00> : vector<16x16xf32>
    %46 = tpu.matmul %44, %45, %cst_45 {dimension_numbers = #tpu.dot_dimension_numbers<[1], [0], [0], [1], [0, 0, 1, 1], [], []>} : vector<16x896xf32>, vector<896x16xf32>, vector<16x16xf32> -> vector<16x16xf32>
    %47 = vector.shape_cast %46 : vector<16x16xf32> to vector<1x16x16xf32>
    %c0_46 = arith.constant 0 : index
    %48 = memref.load %arg5[%c0_46] : memref<1xf32, #tpu.memory_space<smem>>
    %49 = vector.broadcast %48 : f32 to vector<1x16x16xf32>
    %50 = arith.addf %47, %49 : vector<1x16x16xf32>
    %51 = arith.negf %50 : vector<1x16x16xf32>
    %52 = math.exp %51 : vector<1x16x16xf32>
    %cst_47 = arith.constant 1.000000e+00 : f32
    %53 = vector.broadcast %cst_47 : f32 to vector<1x16x16xf32>
    %54 = arith.addf %53, %52 : vector<1x16x16xf32>
    %55 = arith.divf %53, %54 : vector<1x16x16xf32>
    %56 = vector.shape_cast %55 : vector<1x16x16xf32> to vector<1x1x256xf32>
    %c0_48 = arith.constant 0 : index
    %c0_49 = arith.constant 0 : index
    %c0_50 = arith.constant 0 : index
    %57 = vector.load %arg6[%c0_48, %c0_49, %c0_50] : memref<1x32x256xf32, #tpu.memory_space<vmem>>, vector<1x32x256xf32>
    %58 = vector.broadcast %56 : vector<1x1x256xf32> to vector<1x32x256xf32>
    %59 = arith.mulf %57, %58 : vector<1x32x256xf32>
    %c0_51 = arith.constant 0 : index
    %c0_52 = arith.constant 0 : index
    %c0_53 = arith.constant 0 : index
    %60 = vector.load %arg6[%c0_51, %c0_52, %c0_53] : memref<1x32x256xf32, #tpu.memory_space<vmem>>, vector<1x32x256xf32>
    tpu.vector_store %arg6[%c0_51, %c0_52, %c0_53], %59 {strides = array<i32>} : memref<1x32x256xf32, #tpu.memory_space<vmem>>, vector<1x32x256xf32>,
    return
  }
  func.func @transform_0(%arg0: i32) -> (i32, i32, i32) {
    %c0_i32 = arith.constant 0 : i32
    %c0_i32_0 = arith.constant 0 : i32
    %c0_i32_1 = arith.constant 0 : i32
    return %arg0, %c0_i32, %c0_i32_0 : i32, i32, i32
  }
  func.func @transform_1(%arg0: i32) -> (i32, i32) {
    %c0_i32 = arith.constant 0 : i32
    %c0_i32_0 = arith.constant 0 : i32
    %c0_i32_1 = arith.constant 0 : i32
    return %c0_i32, %c0_i32_0 : i32, i32
  }
  func.func @transform_2(%arg0: i32) -> (i32, i32) {
    %c0_i32 = arith.constant 0 : i32
    %c0_i32_0 = arith.constant 0 : i32
    %c0_i32_1 = arith.constant 0 : i32
    return %c0_i32, %c0_i32_0 : i32, i32
  }
  func.func @transform_3(%arg0: i32) -> (i32, i32) {
    %c0_i32 = arith.constant 0 : i32
    %c0_i32_0 = arith.constant 0 : i32
    %c0_i32_1 = arith.constant 0 : i32
    return %c0_i32, %c0_i32_0 : i32, i32
  }
  func.func @transform_4(%arg0: i32) -> i32 {
    %c0_i32 = arith.constant 0 : i32
    %c0_i32_0 = arith.constant 0 : i32
    return %c0_i32 : i32
  }
  func.func @transform_5(%arg0: i32) -> (i32, i32, i32) {
    %c0_i32 = arith.constant 0 : i32
    %c0_i32_0 = arith.constant 0 : i32
    %c0_i32_1 = arith.constant 0 : i32
    return %arg0, %c0_i32, %c0_i32_0 : i32, i32, i32
  }
}

</mosaic_0001>

<llo_original>
// kernel: tpu_custom_call.1
$region0: #{tpu_custom_call.1}
  #allocation0 [shape = 'u32[]', space=smem, size = 0x4, offset = 0x4, fixed_abs, tag = 'smem constant byte address 0x4 - core index']
  #allocation1 [shape = 'u32[144,128]{1,0:T(1,128)}', space=vmem, size = 0x12000, scoped, tag = 'internal scratch']
  #allocation2 [shape = 'f32[1,22,128]{2,1,0:T(8,128)}', space=vmem, size = 0x3000, scoped, tag = 'scratch operand']
  #allocation3 [shape = 'f32[1]{0:T(128)S(6)}', space=smem, size = 0x200, scoped, tag = 'scoped memory for tpu_custom_call.1']
  %s0 = inlined_call_operand.vmem [shape: f32[2,32,256], index: 0, kind: input, shape index: {}]
  %s1 = inlined_call_operand.vmem [shape: f32[32,128], index: 1, kind: input, shape index: {}]
  %s2 = inlined_call_operand.vmem [shape: f32[128,32], index: 2, kind: input, shape index: {}]
  %s3 = inlined_call_operand.vmem [shape: f32[896,16], index: 3, kind: input, shape index: {}]
  %s4 = inlined_call_operand.<no memory space> [shape: f32[1], index: 4, kind: input, shape index: {}]
  %s5 = inlined_call_operand.hbm [shape: f32[2,32,256], index: 5, kind: output, shape index: {}]
  %s6 = sld [smem:[#allocation0]]
  $region53: #{tpu_custom_call.1} parent=0
    _
  %s8 = ssub.s32 1, %s6
  %s9 = scalar_select 0, %s8, %s6
  %10 = sst [smem:[#allocation3]] %s4
  $region1: #{tpu_custom_call.1} parent=0
    #allocation4 [shape = 'u8[65536]{0}', space=vmem, size = 0x10000, scoped, tag = 'output window, operand 0']
    #allocation5 [shape = 's32[2]{0}', space=sflag, size = 0x8, scoped, tag = 'scoped memory for tpu_custom_call.1']
    %11 = vsyncpa [#allocation5], 0
    %s12 = scalar_lea.sflag [#allocation5], 1
    %13 = vsyncpa %s12, 0
    loop: start=0, step=1, limit=4
    $region2: #{tpu_custom_call.1} parent=1 // loop_pre_header
      _
    $region3: #{tpu_custom_call.1} parent=1 // loop_header
      %s15 = sphi 0, %s19
      %p16 = scmp.ge.s32.totalorder %s15, 4
      %s25 = sphi 0, %s27
      %s28 = sphi 0, %s25
      %s29 = sphi 0, %s28
      %s45 = sphi 0, %s29
      %s49 = sphi 0, %s49
      %s51 = sphi 0, %s49
      %s52 = sphi 0, %s51
      %s66 = sphi 0, %s52
      %s70 = sphi 0, %s70
      %s72 = sphi 0, %s70
      %s73 = sphi 0, %s72
      %s87 = sphi 0, %s73
      %s91 = sphi 0, %s91
      %s93 = sphi 0, %s91
      %s94 = sphi 0, %s93
      %s108 = sphi 0, %s94
      %s112 = sphi 0, %s112
      %s114 = sphi 0, %s112
      %s115 = sphi 0, %s114
      %s129 = sphi 0, %s115
      %s135 = sphi 0, %s137
      %s138 = sphi 0, %s135
      %s139 = sphi 0, %s138
      %s155 = sphi 0, %s139
    $region4: #{tpu_custom_call.1} parent=1 // loop_header_branch
      %18 = sbr.rel (%p16) target = $region8
    $region5: #{tpu_custom_call.1} parent=1 // loop_body
      %s20 = ssub.s32 %s15, 1
      %s21 = ssub.s32 %s15, 2
      %s22 = sadd.s32 %s15, 1
      %s23 = ssub.s32 %s15, %s22
      %p24 = scmp.eq.s32.totalorder %s23, 0
      %s26 = sadd.s32 %s25, 1
      %s27 = scalar_select %p24, %s25, %s26
      %p30 = pneg %p24
      %p31 = scmp.eq.s32.totalorder %s15, 1
      %p32 = por %p30, %p31
      %p33 = scmp.ne.s32.totalorder %s25, %s28
      %p34 = scmp.eq.s32.totalorder %s15, 0
      %p35 = por %p33, %p34
      %p36 = scmp.ne.s32.totalorder %s25, %s28
      %p37 = scmp.eq.s32.totalorder %s20, 1
      %p38 = por %p36, %p37
      %p39 = scmp.ne.s32.totalorder %s28, %s29
      %p40 = scmp.eq.s32.totalorder %s20, 0
      %p41 = por %p39, %p40
      %p42 = scmp.ne.s32.totalorder %s28, %s29
      %p43 = scmp.eq.s32.totalorder %s21, 1
      %p44 = por %p42, %p43
      %p46 = scmp.ne.s32.totalorder %s29, %s45
      %p47 = scmp.eq.s32.totalorder %s21, 0
      %p48 = por %p46, %p47
      %s50 = sadd.s32 %s49, 1
      %p53 = scmp.eq.s32.totalorder %s15, 1
      %p54 = scmp.ne.s32.totalorder %s49, %s51
      %p55 = scmp.eq.s32.totalorder %s15, 0
      %p56 = por %p54, %p55
      %p57 = scmp.ne.s32.totalorder %s49, %s51
      %p58 = scmp.eq.s32.totalorder %s20, 1
      %p59 = por %p57, %p58
      %p60 = scmp.ne.s32.totalorder %s51, %s52
      %p61 = scmp.eq.s32.totalorder %s20, 0
      %p62 = por %p60, %p61
      %p63 = scmp.ne.s32.totalorder %s51, %s52
      %p64 = scmp.eq.s32.totalorder %s21, 1
      %p65 = por %p63, %p64
      %p67 = scmp.ne.s32.totalorder %s52, %s66
      %p68 = scmp.eq.s32.totalorder %s21, 0
      %p69 = por %p67, %p68
      %s71 = sadd.s32 %s70, 1
      %p74 = scmp.eq.s32.totalorder %s15, 1
      %p75 = scmp.ne.s32.totalorder %s70, %s72
      %p76 = scmp.eq.s32.totalorder %s15, 0
      %p77 = por %p75, %p76
      %p78 = scmp.ne.s32.totalorder %s70, %s72
      %p79 = scmp.eq.s32.totalorder %s20, 1
      %p80 = por %p78, %p79
      %p81 = scmp.ne.s32.totalorder %s72, %s73
      %p82 = scmp.eq.s32.totalorder %s20, 0
      %p83 = por %p81, %p82
      %p84 = scmp.ne.s32.totalorder %s72, %s73
      %p85 = scmp.eq.s32.totalorder %s21, 1
      %p86 = por %p84, %p85
      %p88 = scmp.ne.s32.totalorder %s73, %s87
      %p89 = scmp.eq.s32.totalorder %s21, 0
      %p90 = por %p88, %p89
      %s92 = sadd.s32 %s91, 1
      %p95 = scmp.eq.s32.totalorder %s15, 1
      %p96 = scmp.ne.s32.totalorder %s91, %s93
      %p97 = scmp.eq.s32.totalorder %s15, 0
      %p98 = por %p96, %p97
      %p99 = scmp.ne.s32.totalorder %s91, %s93
      %p100 = scmp.eq.s32.totalorder %s20, 1
      %p101 = por %p99, %p100
      %p102 = scmp.ne.s32.totalorder %s93, %s94
      %p103 = scmp.eq.s32.totalorder %s20, 0
      %p104 = por %p102, %p103
      %p105 = scmp.ne.s32.totalorder %s93, %s94
      %p106 = scmp.eq.s32.totalorder %s21, 1
      %p107 = por %p105, %p106
      %p109 = scmp.ne.s32.totalorder %s94, %s108
      %p110 = scmp.eq.s32.totalorder %s21, 0
      %p111 = por %p109, %p110
      %s113 = sadd.s32 %s112, 1
      %p116 = scmp.eq.s32.totalorder %s15, 1
      %p117 = scmp.ne.s32.totalorder %s112, %s114
      %p118 = scmp.eq.s32.totalorder %s15, 0
      %p119 = por %p117, %p118
      %p120 = scmp.ne.s32.totalorder %s112, %s114
      %p121 = scmp.eq.s32.totalorder %s20, 1
      %p122 = por %p120, %p121
      %p123 = scmp.ne.s32.totalorder %s114, %s115
      %p124 = scmp.eq.s32.totalorder %s20, 0
      %p125 = por %p123, %p124
      %p126 = scmp.ne.s32.totalorder %s114, %s115
      %p127 = scmp.eq.s32.totalorder %s21, 1
      %p128 = por %p126, %p127
      %p130 = scmp.ne.s32.totalorder %s115, %s129
      %p131 = scmp.eq.s32.totalorder %s21, 0
      %p132 = por %p130, %p131
      %s133 = ssub.s32 %s15, %s22
      %p134 = scmp.eq.s32.totalorder %s133, 0
      %s136 = sadd.s32 %s135, 1
      %s137 = scalar_select %p134, %s135, %s136
      %p140 = pneg %p134
      %p141 = scmp.eq.s32.totalorder %s15, 1
      %p142 = por %p140, %p141
      %p143 = scmp.ne.s32.totalorder %s135, %s138
      %p144 = scmp.eq.s32.totalorder %s15, 0
      %p145 = por %p143, %p144
      %p146 = scmp.ne.s32.totalorder %s135, %s138
      %p147 = scmp.eq.s32.totalorder %s20, 1
      %p148 = por %p146, %p147
      %p149 = scmp.ne.s32.totalorder %s138, %s139
      %p150 = scmp.eq.s32.totalorder %s20, 0
      %p151 = por %p149, %p150
      %p152 = scmp.ne.s32.totalorder %s138, %s139
      %p153 = scmp.eq.s32.totalorder %s21, 1
      %p154 = por %p152, %p153
      %p156 = scmp.ne.s32.totalorder %s139, %s155
      %p157 = scmp.eq.s32.totalorder %s21, 0
      %p158 = por %p156, %p157
      %p159 = scmp.le.s32.totalorder 1, %s15
      %p160 = scmp.lt.s32.totalorder %s15, 3
      %p161 = pnand %p159, %p160
      %p162 = pneg %p161
      // Predicated region
      $region9: #{tpu_custom_call.1} parent=5 // pred_check
        _
      $region10: #{tpu_custom_call.1} parent=5 // pred_check_branch
        %164 = sbr.rel (%p161) target = $region12
      $region11: #{tpu_custom_call.1} parent=5 // pred_region
        %s165 = ssub.s32 %s15, 1
        // Predicated region
        $region13: #{tpu_custom_call.1} parent=11 // pred_check
          %p166 = pneg %p62
        $region14: #{tpu_custom_call.1} parent=11 // pred_check_branch
          %168 = sbr.rel (%p166) target = $region16
        $region15: #{tpu_custom_call.1} parent=11 // pred_region
          _
        $region16: #{tpu_custom_call.1} parent=11 // pred_fallthru
          _
        // Predicated region
        $region17: #{tpu_custom_call.1} parent=11 // pred_check
          %p169 = pneg %p83
        $region18: #{tpu_custom_call.1} parent=11 // pred_check_branch
          %171 = sbr.rel (%p169) target = $region20
        $region19: #{tpu_custom_call.1} parent=11 // pred_region
          _
        $region20: #{tpu_custom_call.1} parent=11 // pred_fallthru
          _
        // Predicated region
        $region21: #{tpu_custom_call.1} parent=11 // pred_check
          %p172 = pneg %p104
        $region22: #{tpu_custom_call.1} parent=11 // pred_check_branch
          %174 = sbr.rel (%p172) target = $region24
        $region23: #{tpu_custom_call.1} parent=11 // pred_region
          _
        $region24: #{tpu_custom_call.1} parent=11 // pred_fallthru
          _
        // Predicated region
        $region25: #{tpu_custom_call.1} parent=11 // pred_check
          %p175 = pneg %p125
        $region26: #{tpu_custom_call.1} parent=11 // pred_check_branch
          %177 = sbr.rel (%p175) target = $region28
        $region27: #{tpu_custom_call.1} parent=11 // pred_region
          _
        $region28: #{tpu_custom_call.1} parent=11 // pred_fallthru
          _
      $region12: #{tpu_custom_call.1} parent=5 // pred_fallthru
        _
      %p178 = scmp.lt.s32.totalorder %s15, 2
      // Predicated region
      $region29: #{tpu_custom_call.1} parent=5 // pred_check
        %p179 = pneg %p178
      $region30: #{tpu_custom_call.1} parent=5 // pred_check_branch
        %181 = sbr.rel (%p179) target = $region32
      $region31: #{tpu_custom_call.1} parent=5 // pred_region
        // Predicated region
        $region33: #{tpu_custom_call.1} parent=31 // pred_check
          %p182 = pneg %p35
        $region34: #{tpu_custom_call.1} parent=31 // pred_check_branch
          %184 = sbr.rel (%p182) target = $region36
        $region35: #{tpu_custom_call.1} parent=31 // pred_region
          %p185 = scmp.lt.s32.totalorder %s15, 1
          %s186 = scalar_select %p185, %s15, 1
          %s187 = smul.addr %s186, 8
          %s188 = smul.addr %s187, 8
          %s189 = scalar_lea.vmem %s0, %s188
        $region36: #{tpu_custom_call.1} parent=31 // pred_fallthru
          _
      $region32: #{tpu_custom_call.1} parent=5 // pred_fallthru
        _
      %p190 = scmp.le.s32.totalorder 1, %s15
      %p191 = scmp.lt.s32.totalorder %s15, 3
      %p192 = pnand %p190, %p191
      %p193 = pneg %p192
      // Predicated region
      $region37: #{tpu_custom_call.1} parent=5 // pred_check
        _
      $region38: #{tpu_custom_call.1} parent=5 // pred_check_branch
        %195 = sbr.rel (%p192) target = $region40
      $region39: #{tpu_custom_call.1} parent=5 // pred_region
        %s196 = ssub.s32 %s15, 1
        %p197 = scmp.lt.s32.totalorder %s20, 1
        %s198 = scalar_select %p197, %s20, 1
        %s199 = smul.addr %s198, 8
        %s200 = smul.addr %s199, 8
        %s201 = scalar_lea.vmem %s0, %s200
        %p202 = pneg %p41
        %p203 = pneg %p38
        %p204 = pneg %p62
        %p205 = pneg %p59
        %p206 = pneg %p83
        %p207 = pneg %p80
        %p208 = pneg %p104
        %p209 = pneg %p101
        %p210 = pneg %p125
        %p211 = pneg %p122
        %p212 = pneg %p151
        %p213 = pneg %p148
        %s214 = sand.u32 %s138, 1
        %s215 = scalar_lea.sflag [#allocation5], %s214
        %s216 = sand.u32 %s138, 1
        %s217 = smul.addr %s216, 64
        %s218 = scalar_lea.vmem [#allocation4], %s217
        %p219 = scmp.lt.s32.totalorder %s20, 1
        %s220 = scalar_select %p219, %s20, 1
        %s221 = smul.addr %s220, 8
        %s222 = smul.addr %s221, 8
        %s223 = scalar_lea.vmem %s0, %s222
        %v224 = vld [vmem:[%s223] sm:$0xff]
        %v225 = vld [vmem:[%s223 + $0x8] sm:$0xff]
        %v226 = vld [vmem:[%s223 + $0x10] sm:$0xff]
        %v227 = vld [vmem:[%s223 + $0x18] sm:$0xff]
        %v228 = vld [vmem:[%s223 + $0x20] sm:$0xff]
        %v229 = vld [vmem:[%s223 + $0x28] sm:$0xff]
        %v230 = vld [vmem:[%s223 + $0x30] sm:$0xff]
        %v231 = vld [vmem:[%s223 + $0x38] sm:$0xff]
        %v232 = vadd.f32 %v224, %v225
        %233 = vadd.xlane.f32.xlu0 %v232
        %v234 = vpop.xlane.xlu0 %233
        %v235 = vadd.f32 %v226, %v227
        %236 = vadd.xlane.f32.xlu0 %v235
        %v237 = vpop.xlane.xlu0 %236
        %v238 = vadd.f32 %v228, %v229
        %239 = vadd.xlane.f32.xlu0 %v238
        %v240 = vpop.xlane.xlu0 %239
        %v241 = vadd.f32 %v230, %v231
        %242 = vadd.xlane.f32.xlu0 %v241
        %v243 = vpop.xlane.xlu0 %242
        %v244 = vmul.f32 %v234, 0.00390625
        %v245 = vmul.f32 %v237, 0.00390625
        %v246 = vmul.f32 %v240, 0.00390625
        %v247 = vmul.f32 %v243, 0.00390625
        %v248 = vmax.f32 %v224, %v225
        %249 = vmax.xlane.f32.xlu0 %v248
        %v250 = vpop.xlane.xlu0 %249
        %v251 = vmax.f32 %v226, %v227
        %252 = vmax.xlane.f32.xlu0 %v251
        %v253 = vpop.xlane.xlu0 %252
        %v254 = vmax.f32 %v228, %v229
        %255 = vmax.xlane.f32.xlu0 %v254
        %v256 = vpop.xlane.xlu0 %255
        %v257 = vmax.f32 %v230, %v231
        %258 = vmax.xlane.f32.xlu0 %v257
        %v259 = vpop.xlane.xlu0 %258
        %v264 = vlaneseq
        %v265 = vand.u32 %v264, 127
        %v266 = vlaneseq
        %v267 = vshrl.u32 %v266, 7
        %v268 = vsub.s32 %v265, %v267
        %v269 = vrot.slane %v244, %v268
        %v270 = vadd.s32 %v265, 4294967288
        %v271 = vlaneseq
        %v272 = vshrl.u32 %v271, 7
        %v273 = vsub.s32 %v270, %v272
        %v274 = vrot.slane %v245, %v273
        %vm275 = vcmask 130112
        %v276 = vsel %vm275, %v274, %v269
        %v277 = vadd.s32 %v265, 4294967280
        %v278 = vlaneseq
        %v279 = vshrl.u32 %v278, 7
        %v280 = vsub.s32 %v277, %v279
        %v281 = vrot.slane %v246, %v280
        %vm282 = vcmask 195712
        %v283 = vsel %vm282, %v281, %v276
        %v284 = vadd.s32 %v265, 4294967272
        %v285 = vlaneseq
        %v286 = vshrl.u32 %v285, 7
        %v287 = vsub.s32 %v284, %v286
        %v288 = vrot.slane %v247, %v287
        %vm289 = vcmask 261312
        %v290 = vsel %vm289, %v288, %v283
        %v296 = vlaneseq
        %v297 = vshrl.u32 %v296, 7
        %v298 = vsub.s32 %v265, %v297
        %v299 = vrot.slane %v250, %v298
        %v300 = vlaneseq
        %v301 = vshrl.u32 %v300, 7
        %v302 = vsub.s32 %v270, %v301
        %v303 = vrot.slane %v253, %v302
        %v304 = vsel %vm275, %v303, %v299
        %v305 = vlaneseq
        %v306 = vshrl.u32 %v305, 7
        %v307 = vsub.s32 %v277, %v306
        %v308 = vrot.slane %v256, %v307
        %v309 = vsel %vm282, %v308, %v304
        %v310 = vlaneseq
        %v311 = vshrl.u32 %v310, 7
        %v312 = vsub.s32 %v284, %v311
        %v313 = vrot.slane %v259, %v312
        %v314 = vsel %vm289, %v313, %v309
        %vm316 = vcmask 1040384
        %v317 = vsel %vm316, %v290, %v314
        %v318 = vld [vmem:[%s1] sm:$0xff]
        %v319 = vld [vmem:[%s1 + $0x8] sm:$0xff]
        %v320 = vld [vmem:[%s1 + $0x10] sm:$0xff]
        %v321 = vld [vmem:[%s1 + $0x18] sm:$0xff]
        %vm322 = vcmask 261120
        %v324 = vsel %vm322, %v317, 0
        %326 = vmatprep.subr.mxu0 0.0
        %327 = vmatpush1.msra.mxu0 %v318
        %328 = vmatprep.subr.mxu0 0.0
        %329 = vmatpush1.msra.mxu0 %v319
        %330 = vmatprep.subr.mxu0 0.0
        %331 = vmatpush1.msra.mxu0 %v320
        %332 = vmatprep.subr.mxu0 0.0
        %333 = vmatpush1.msra.mxu0 %v321
        %334 = vmatprep.subr.mxu0 0.0
        %335 = vmatpush1.msra.mxu0 0.0
        %336 = vmatprep.subr.mxu0 0.0
        %337 = vmatpush1.msra.mxu0 0.0
        %338 = vmatprep.subr.mxu0 0.0
        %339 = vmatpush1.msra.mxu0 0.0
        %340 = vmatprep.subr.mxu0 0.0
        %341 = vmatpush1.msra.mxu0 0.0
        %342 = vmatprep.subr.mxu0 0.0
        %343 = vmatpush1.msra.mxu0 0.0
        %344 = vmatprep.subr.mxu0 0.0
        %345 = vmatpush1.msra.mxu0 0.0
        %346 = vmatprep.subr.mxu0 0.0
        %347 = vmatpush1.msra.mxu0 0.0
        %348 = vmatprep.subr.mxu0 0.0
        %349 = vmatpush1.msra.mxu0 0.0
        %350 = vmatprep.subr.mxu0 0.0
        %351 = vmatpush1.msra.mxu0 0.0
        %352 = vmatprep.subr.mxu0 0.0
        %353 = vmatpush1.msra.mxu0 0.0
        %354 = vmatprep.subr.mxu0 0.0
        %355 = vmatpush1.msra.mxu0 0.0
        %356 = vmatprep.subr.mxu0 0.0
        %357 = vmatpush1.msra.mxu0 0.0
        %358 = vmatprep.subr.mxu0 0.0
        %359 = vmatpush1.msra.mxu0 0.0
        %360 = vmatprep.subr.mxu0 0.0
        %361 = vmatpush1.msra.mxu0 0.0
        %362 = vmatprep.subr.mxu0 0.0
        %363 = vmatpush1.msra.mxu0 0.0
        %364 = vmatprep.subr.mxu0 0.0
        %365 = vmatpush1.msra.mxu0 0.0
        %366 = vmatprep.subr.mxu0 0.0
        %367 = vmatpush1.msra.mxu0 0.0
        %368 = vmatprep.subr.mxu0 0.0
        %369 = vmatpush1.msra.mxu0 0.0
        %370 = vmatprep.subr.mxu0 0.0
        %371 = vmatpush1.msra.mxu0 0.0
        %372 = vmatprep.subr.mxu0 0.0
        %373 = vmatpush1.msra.mxu0 0.0
        %374 = vmatprep.subr.mxu0 0.0
        %375 = vmatpush1.msra.mxu0 0.0
        %376 = vmatprep.subr.mxu0 0.0
        %377 = vmatpush1.msra.mxu0 0.0
        %378 = vmatprep.subr.mxu0 0.0
        %379 = vmatpush1.msra.mxu0 0.0
        %380 = vmatprep.subr.mxu0 0.0
        %381 = vmatpush1.msra.mxu0 0.0
        %382 = vmatprep.subr.mxu0 0.0
        %383 = vmatpush1.msra.mxu0 0.0
        %384 = vmatprep.subr.mxu0 0.0
        %385 = vmatpush1.msra.mxu0 0.0
        %386 = vmatprep.subr.mxu0 0.0
        %387 = vmatpush1.msra.mxu0 0.0
        %388 = vmatprep.subr.mxu0 0.0
        %389 = vmatpush1.msra.mxu0 0.0
        %390 = vmatprep.mubr.f32.mxu0 0.0
        %391 = vmatmul.mubr.f32.gmra.mrb[0].mxu0 %v324
        %v392 = vpop.f32.mrb[0].mxu0
        %v393 = vadd.f32 0.0, %v392
        %v394 = vpop.f32.mrb[0].mxu0
        %395 = vdwg.mxu0
        %v396 = vmax.f32 %v393, 0.0
        %v397 = vld [vmem:[%s2] sm:$0xff]
        %v398 = vld [vmem:[%s2 + $0x8] sm:$0xff]
        %v399 = vld [vmem:[%s2 + $0x10] sm:$0xff]
        %v400 = vld [vmem:[%s2 + $0x18] sm:$0xff]
        %v401 = vld [vmem:[%s2 + $0x20] sm:$0xff]
        %v402 = vld [vmem:[%s2 + $0x28] sm:$0xff]
        %v403 = vld [vmem:[%s2 + $0x30] sm:$0xff]
        %v404 = vld [vmem:[%s2 + $0x38] sm:$0xff]
        %v405 = vld [vmem:[%s2 + $0x40] sm:$0xff]
        %v406 = vld [vmem:[%s2 + $0x48] sm:$0xff]
        %v407 = vld [vmem:[%s2 + $0x50] sm:$0xff]
        %v408 = vld [vmem:[%s2 + $0x58] sm:$0xff]
        %v409 = vld [vmem:[%s2 + $0x60] sm:$0xff]
        %v410 = vld [vmem:[%s2 + $0x68] sm:$0xff]
        %v411 = vld [vmem:[%s2 + $0x70] sm:$0xff]
        %v412 = vld [vmem:[%s2 + $0x78] sm:$0xff]
        %413 = vmatprep.subr.mxu0 0.0
        %414 = vmatpush1.msra.mxu0 %v397
        %415 = vmatprep.subr.mxu0 0.0
        %416 = vmatpush1.msra.mxu0 %v398
        %417 = vmatprep.subr.mxu0 0.0
        %418 = vmatpush1.msra.mxu0 %v399
        %419 = vmatprep.subr.mxu0 0.0
        %420 = vmatpush1.msra.mxu0 %v400
        %421 = vmatprep.subr.mxu0 0.0
        %422 = vmatpush1.msra.mxu0 %v401
        %423 = vmatprep.subr.mxu0 0.0
        %424 = vmatpush1.msra.mxu0 %v402
        %425 = vmatprep.subr.mxu0 0.0
        %426 = vmatpush1.msra.mxu0 %v403
        %427 = vmatprep.subr.mxu0 0.0
        %428 = vmatpush1.msra.mxu0 %v404
        %429 = vmatprep.subr.mxu0 0.0
        %430 = vmatpush1.msra.mxu0 %v405
        %431 = vmatprep.subr.mxu0 0.0
        %432 = vmatpush1.msra.mxu0 %v406
        %433 = vmatprep.subr.mxu0 0.0
        %434 = vmatpush1.msra.mxu0 %v407
        %435 = vmatprep.subr.mxu0 0.0
        %436 = vmatpush1.msra.mxu0 %v408
        %437 = vmatprep.subr.mxu0 0.0
        %438 = vmatpush1.msra.mxu0 %v409
        %439 = vmatprep.subr.mxu0 0.0
        %440 = vmatpush1.msra.mxu0 %v410
        %441 = vmatprep.subr.mxu0 0.0
        %442 = vmatpush1.msra.mxu0 %v411
        %443 = vmatprep.subr.mxu0 0.0
        %444 = vmatpush1.msra.mxu0 %v412
        %445 = vmatprep.subr.mxu0 0.0
        %446 = vmatpush1.msra.mxu0 0.0
        %447 = vmatprep.subr.mxu0 0.0
        %448 = vmatpush1.msra.mxu0 0.0
        %449 = vmatprep.subr.mxu0 0.0
        %450 = vmatpush1.msra.mxu0 0.0
        %451 = vmatprep.subr.mxu0 0.0
        %452 = vmatpush1.msra.mxu0 0.0
        %453 = vmatprep.subr.mxu0 0.0
        %454 = vmatpush1.msra.mxu0 0.0
        %455 = vmatprep.subr.mxu0 0.0
        %456 = vmatpush1.msra.mxu0 0.0
        %457 = vmatprep.subr.mxu0 0.0
        %458 = vmatpush1.msra.mxu0 0.0
        %459 = vmatprep.subr.mxu0 0.0
        %460 = vmatpush1.msra.mxu0 0.0
        %461 = vmatprep.subr.mxu0 0.0
        %462 = vmatpush1.msra.mxu0 0.0
        %463 = vmatprep.subr.mxu0 0.0
        %464 = vmatpush1.msra.mxu0 0.0
        %465 = vmatprep.subr.mxu0 0.0
        %466 = vmatpush1.msra.mxu0 0.0
        %467 = vmatprep.subr.mxu0 0.0
        %468 = vmatpush1.msra.mxu0 0.0
        %469 = vmatprep.subr.mxu0 0.0
        %470 = vmatpush1.msra.mxu0 0.0
        %471 = vmatprep.subr.mxu0 0.0
        %472 = vmatpush1.msra.mxu0 0.0
        %473 = vmatprep.subr.mxu0 0.0
        %474 = vmatpush1.msra.mxu0 0.0
        %475 = vmatprep.subr.mxu0 0.0
        %476 = vmatpush1.msra.mxu0 0.0
        %477 = vmatprep.mubr.f32.mxu0 0.0
        %478 = vmatmul.mubr.f32.gmra.mrb[0].mxu0 %v396
        %v479 = vpop.f32.mrb[0].mxu0
        %v480 = vadd.f32 0.0, %v479
        %v481 = vpop.f32.mrb[0].mxu0
        %482 = vdwg.mxu0
        %v484 = vrot.slane %v480, 1
        %v486 = vadd.f32 %v480, %v484
        %v487 = vxor.u32 %v486, 2147483648
        %v488 = vmul.f32 %v487, 1.442695
        %v489 = vpow.pop %v488
        %v490 = vadd.f32 %v489, 1.0
        %v491 = vrcp.pop %v490
        %v492 = vmul.f32 1.0, %v491
        %v493 = vlaneseq
        %v494 = vshrl.u32 %v493, 7
        %v495 = vsub.s32 0, %v494
        %v496 = vrot.slane %v492, %v495
        %498 = vbcast.lane.b32.xlu0 %v496, 256
        %v499 = vpop.permute.xlu0 %498
        %s501 = sor.u32 256, 8
        %502 = vbcast.lane.b32.xlu0 %v496, %s501
        %v503 = vpop.permute.xlu0 %502
        %s505 = sor.u32 256, 16
        %506 = vbcast.lane.b32.xlu0 %v496, %s505
        %v507 = vpop.permute.xlu0 %506
        %s509 = sor.u32 256, 24
        %510 = vbcast.lane.b32.xlu0 %v496, %s509
        %v511 = vpop.permute.xlu0 %510
        %v512 = vmul.f32 %v224, %v499
        %v513 = vmul.f32 %v225, %v499
        %v514 = vmul.f32 %v226, %v503
        %v515 = vmul.f32 %v227, %v503
        %v516 = vmul.f32 %v228, %v507
        %v517 = vmul.f32 %v229, %v507
        %v518 = vmul.f32 %v230, %v511
        %v519 = vmul.f32 %v231, %v511
        %520 = vst [vmem:[%s218] sm:$0xff] %v512
        %521 = vst [vmem:[%s218 + $0x8] sm:$0xff] %v513
        %522 = vst [vmem:[%s218 + $0x10] sm:$0xff] %v514
        %523 = vst [vmem:[%s218 + $0x18] sm:$0xff] %v515
        %524 = vst [vmem:[%s218 + $0x20] sm:$0xff] %v516
        %525 = vst [vmem:[%s218 + $0x28] sm:$0xff] %v517
        %526 = vst [vmem:[%s218 + $0x30] sm:$0xff] %v518
        %527 = vst [vmem:[%s218 + $0x38] sm:$0xff] %v519
        %v528 = vadd.f32 %v512, %v514
        %v529 = vadd.f32 %v528, %v516
        %v530 = vadd.f32 %v529, %v518
        %v531 = vrot.slane %v530, 4
        %v532 = vadd.f32 %v530, %v531
        %v533 = vrot.slane %v532, 2
        %v534 = vadd.f32 %v532, %v533
        %v535 = vrot.slane %v534, 1
        %v536 = vadd.f32 %v534, %v535
        %v537 = vadd.f32 %v513, %v515
        %v538 = vadd.f32 %v537, %v517
        %v539 = vadd.f32 %v538, %v519
        %v540 = vrot.slane %v539, 4
        %v541 = vadd.f32 %v539, %v540
        %v542 = vrot.slane %v541, 2
        %v543 = vadd.f32 %v541, %v542
        %v544 = vrot.slane %v543, 1
        %v545 = vadd.f32 %v543, %v544
        %v546 = vmul.f32 %v536, 0.03125
        %v547 = vmul.f32 %v545, 0.03125
        %549 = vrot.lane.b32.xlu0 %v546, 112
        %v550 = vpop.permute.xlu0 %549
        %552 = vrot.lane.b32.xlu0 %v546, 96
        %v553 = vpop.permute.xlu0 %552
        %555 = vrot.lane.b32.xlu0 %v546, 80
        %v556 = vpop.permute.xlu0 %555
        %558 = vrot.lane.b32.xlu0 %v546, 64
        %v559 = vpop.permute.xlu0 %558
        %561 = vrot.lane.b32.xlu0 %v546, 48
        %v562 = vpop.permute.xlu0 %561
        %564 = vrot.lane.b32.xlu0 %v546, 32
        %v565 = vpop.permute.xlu0 %564
        %567 = vrot.lane.b32.xlu0 %v546, 16
        %v568 = vpop.permute.xlu0 %567
        %571 = vrot.lane.b32.xlu0 %v547, 112
        %v572 = vpop.permute.xlu0 %571
        %574 = vrot.lane.b32.xlu0 %v547, 96
        %v575 = vpop.permute.xlu0 %574
        %577 = vrot.lane.b32.xlu0 %v547, 80
        %v578 = vpop.permute.xlu0 %577
        %580 = vrot.lane.b32.xlu0 %v547, 64
        %v581 = vpop.permute.xlu0 %580
        %583 = vrot.lane.b32.xlu0 %v547, 48
        %v584 = vpop.permute.xlu0 %583
        %586 = vrot.lane.b32.xlu0 %v547, 32
        %v587 = vpop.permute.xlu0 %586
        %589 = vrot.lane.b32.xlu0 %v547, 16
        %v590 = vpop.permute.xlu0 %589
        %v592 = vcombine.low %v546, %v553
        %v594 = vunpack.c.l.s4 1983009808
        %v595 = vunpack.c.0.s8 %v594
        %v596 = vlaneseq
        %v597 = vshrl.u32 %v596, 7
        %v598 = vsub.s32 %v595, %v597
        %v599 = vrot.slane %v592, %v598
        %v600 = vcombine.low %v550, %v556
        %v602 = vunpack.c.l.s4 1983009808
        %v603 = vunpack.c.0.s8 %v602
        %v604 = vlaneseq
        %v605 = vshrl.u32 %v604, 7
        %v606 = vsub.s32 %v603, %v605
        %v607 = vrot.slane %v600, %v606
        %v608 = vcombine.low %v559, %v565
        %v610 = vunpack.c.l.s4 1983009808
        %v611 = vunpack.c.0.s8 %v610
        %v612 = vlaneseq
        %v613 = vshrl.u32 %v612, 7
        %v614 = vsub.s32 %v611, %v613
        %v615 = vrot.slane %v608, %v614
        %v616 = vcombine.low %v562, %v568
        %v618 = vunpack.c.l.s4 1983009808
        %v619 = vunpack.c.0.s8 %v618
        %v620 = vlaneseq
        %v621 = vshrl.u32 %v620, 7
        %v622 = vsub.s32 %v619, %v621
        %v623 = vrot.slane %v616, %v622
        %v624 = vcombine.low %v599, %v607
        %v626 = vunpack.c.l.s4 1934713408
        %v627 = vunpack.c.0.s8 %v626
        %v628 = vlaneseq
        %v629 = vshrl.u32 %v628, 7
        %v630 = vsub.s32 %v627, %v629
        %v631 = vrot.slane %v624, %v630
        %v632 = vcombine.low %v615, %v623
        %v634 = vunpack.c.l.s4 1934713408
        %v635 = vunpack.c.0.s8 %v634
        %v636 = vlaneseq
        %v637 = vshrl.u32 %v636, 7
        %v638 = vsub.s32 %v635, %v637
        %v639 = vrot.slane %v632, %v638
        %v640 = vcombine.low %v631, %v639
        %v641 = vcombine.low %v547, %v575
        %v643 = vunpack.c.l.s4 1983009808
        %v644 = vunpack.c.0.s8 %v643
        %v645 = vlaneseq
        %v646 = vshrl.u32 %v645, 7
        %v647 = vsub.s32 %v644, %v646
        %v648 = vrot.slane %v641, %v647
        %v649 = vcombine.low %v572, %v578
        %v651 = vunpack.c.l.s4 1983009808
        %v652 = vunpack.c.0.s8 %v651
        %v653 = vlaneseq
        %v654 = vshrl.u32 %v653, 7
        %v655 = vsub.s32 %v652, %v654
        %v656 = vrot.slane %v649, %v655
        %v657 = vcombine.low %v581, %v587
        %v659 = vunpack.c.l.s4 1983009808
        %v660 = vunpack.c.0.s8 %v659
        %v661 = vlaneseq
        %v662 = vshrl.u32 %v661, 7
        %v663 = vsub.s32 %v660, %v662
        %v664 = vrot.slane %v657, %v663
        %v665 = vcombine.low %v584, %v590
        %v667 = vunpack.c.l.s4 1983009808
        %v668 = vunpack.c.0.s8 %v667
        %v669 = vlaneseq
        %v670 = vshrl.u32 %v669, 7
        %v671 = vsub.s32 %v668, %v670
        %v672 = vrot.slane %v665, %v671
        %v673 = vcombine.low %v648, %v656
        %v675 = vunpack.c.l.s4 1934713408
        %v676 = vunpack.c.0.s8 %v675
        %v677 = vlaneseq
        %v678 = vshrl.u32 %v677, 7
        %v679 = vsub.s32 %v676, %v678
        %v680 = vrot.slane %v673, %v679
        %v681 = vcombine.low %v664, %v672
        %v683 = vunpack.c.l.s4 1934713408
        %v684 = vunpack.c.0.s8 %v683
        %v685 = vlaneseq
        %v686 = vshrl.u32 %v685, 7
        %v687 = vsub.s32 %v684, %v686
        %v688 = vrot.slane %v681, %v687
        %v689 = vcombine.low %v680, %v688
        %v690 = vmax.f32 %v512, %v516
        %v691 = vmax.f32 %v514, %v518
        %v692 = vmax.f32 %v690, %v691
        %v693 = vrot.slane %v692, 4
        %v694 = vmax.f32 %v692, %v693
        %v695 = vrot.slane %v694, 2
        %v696 = vmax.f32 %v694, %v695
        %v697 = vrot.slane %v696, 1
        %v698 = vmax.f32 %v696, %v697
        %v699 = vmax.f32 %v513, %v517
        %v700 = vmax.f32 %v515, %v519
        %v701 = vmax.f32 %v699, %v700
        %v702 = vrot.slane %v701, 4
        %v703 = vmax.f32 %v701, %v702
        %v704 = vrot.slane %v703, 2
        %v705 = vmax.f32 %v703, %v704
        %v706 = vrot.slane %v705, 1
        %v707 = vmax.f32 %v705, %v706
        %709 = vrot.lane.b32.xlu0 %v698, 112
        %v710 = vpop.permute.xlu0 %709
        %712 = vrot.lane.b32.xlu0 %v698, 96
        %v713 = vpop.permute.xlu0 %712
        %715 = vrot.lane.b32.xlu0 %v698, 80
        %v716 = vpop.permute.xlu0 %715
        %718 = vrot.lane.b32.xlu0 %v698, 64
        %v719 = vpop.permute.xlu0 %718
        %721 = vrot.lane.b32.xlu0 %v698, 48
        %v722 = vpop.permute.xlu0 %721
        %724 = vrot.lane.b32.xlu0 %v698, 32
        %v725 = vpop.permute.xlu0 %724
        %727 = vrot.lane.b32.xlu0 %v698, 16
        %v728 = vpop.permute.xlu0 %727
        %731 = vrot.lane.b32.xlu0 %v707, 112
        %v732 = vpop.permute.xlu0 %731
        %734 = vrot.lane.b32.xlu0 %v707, 96
        %v735 = vpop.permute.xlu0 %734
        %737 = vrot.lane.b32.xlu0 %v707, 80
        %v738 = vpop.permute.xlu0 %737
        %740 = vrot.lane.b32.xlu0 %v707, 64
        %v741 = vpop.permute.xlu0 %740
        %743 = vrot.lane.b32.xlu0 %v707, 48
        %v744 = vpop.permute.xlu0 %743
        %746 = vrot.lane.b32.xlu0 %v707, 32
        %v747 = vpop.permute.xlu0 %746
        %749 = vrot.lane.b32.xlu0 %v707, 16
        %v750 = vpop.permute.xlu0 %749
        %v752 = vcombine.low %v698, %v713
        %v754 = vunpack.c.l.s4 1983009808
        %v755 = vunpack.c.0.s8 %v754
        %v756 = vlaneseq
        %v757 = vshrl.u32 %v756, 7
        %v758 = vsub.s32 %v755, %v757
        %v759 = vrot.slane %v752, %v758
        %v760 = vcombine.low %v710, %v716
        %v762 = vunpack.c.l.s4 1983009808
        %v763 = vunpack.c.0.s8 %v762
        %v764 = vlaneseq
        %v765 = vshrl.u32 %v764, 7
        %v766 = vsub.s32 %v763, %v765
        %v767 = vrot.slane %v760, %v766
        %v768 = vcombine.low %v719, %v725
        %v770 = vunpack.c.l.s4 1983009808
        %v771 = vunpack.c.0.s8 %v770
        %v772 = vlaneseq
        %v773 = vshrl.u32 %v772, 7
        %v774 = vsub.s32 %v771, %v773
        %v775 = vrot.slane %v768, %v774
        %v776 = vcombine.low %v722, %v728
        %v778 = vunpack.c.l.s4 1983009808
        %v779 = vunpack.c.0.s8 %v778
        %v780 = vlaneseq
        %v781 = vshrl.u32 %v780, 7
        %v782 = vsub.s32 %v779, %v781
        %v783 = vrot.slane %v776, %v782
        %v784 = vcombine.low %v759, %v767
        %v786 = vunpack.c.l.s4 1934713408
        %v787 = vunpack.c.0.s8 %v786
        %v788 = vlaneseq
        %v789 = vshrl.u32 %v788, 7
        %v790 = vsub.s32 %v787, %v789
        %v791 = vrot.slane %v784, %v790
        %v792 = vcombine.low %v775, %v783
        %v794 = vunpack.c.l.s4 1934713408
        %v795 = vunpack.c.0.s8 %v794
        %v796 = vlaneseq
        %v797 = vshrl.u32 %v796, 7
        %v798 = vsub.s32 %v795, %v797
        %v799 = vrot.slane %v792, %v798
        %v800 = vcombine.low %v791, %v799
        %v801 = vcombine.low %v707, %v735
        %v803 = vunpack.c.l.s4 1983009808
        %v804 = vunpack.c.0.s8 %v803
        %v805 = vlaneseq
        %v806 = vshrl.u32 %v805, 7
        %v807 = vsub.s32 %v804, %v806
        %v808 = vrot.slane %v801, %v807
        %v809 = vcombine.low %v732, %v738
        %v811 = vunpack.c.l.s4 1983009808
        %v812 = vunpack.c.0.s8 %v811
        %v813 = vlaneseq
        %v814 = vshrl.u32 %v813, 7
        %v815 = vsub.s32 %v812, %v814
        %v816 = vrot.slane %v809, %v815
        %v817 = vcombine.low %v741, %v747
        %v819 = vunpack.c.l.s4 1983009808
        %v820 = vunpack.c.0.s8 %v819
        %v821 = vlaneseq
        %v822 = vshrl.u32 %v821, 7
        %v823 = vsub.s32 %v820, %v822
        %v824 = vrot.slane %v817, %v823
        %v825 = vcombine.low %v744, %v750
        %v827 = vunpack.c.l.s4 1983009808
        %v828 = vunpack.c.0.s8 %v827
        %v829 = vlaneseq
        %v830 = vshrl.u32 %v829, 7
        %v831 = vsub.s32 %v828, %v830
        %v832 = vrot.slane %v825, %v831
        %v833 = vcombine.low %v808, %v816
        %v835 = vunpack.c.l.s4 1934713408
        %v836 = vunpack.c.0.s8 %v835
        %v837 = vlaneseq
        %v838 = vshrl.u32 %v837, 7
        %v839 = vsub.s32 %v836, %v838
        %v840 = vrot.slane %v833, %v839
        %v841 = vcombine.low %v824, %v832
        %v843 = vunpack.c.l.s4 1934713408
        %v844 = vunpack.c.0.s8 %v843
        %v845 = vlaneseq
        %v846 = vshrl.u32 %v845, 7
        %v847 = vsub.s32 %v844, %v846
        %v848 = vrot.slane %v841, %v847
        %v849 = vcombine.low %v840, %v848
        %850 = vst [vmem:[#allocation2] sm:$0x7] 0.0
        %851 = vst [vmem:[#allocation2 + $0x13] sm:$0x7] 0.0
        %854 = vrot.lane.b32.xlu0 %v800, 16
        %v855 = vpop.permute.xlu0 %854
        %856 = vrot.lane.b32.xlu0 %v849, 16
        %v857 = vpop.permute.xlu0 %856
        %vm860 = vcmask 130048
        %v861 = vsel %vm860, %v640, %v855
        %v862 = vsel %vm860, %v689, %v857
        %v863 = vsel %vm322, %v861, 0.0
        %v864 = vsel %vm322, %v862, 0.0
        %865 = vst [vmem:[#allocation2 + $0x3] sm:$0xff] %v863
        %866 = vst [vmem:[#allocation2 + $0xb] sm:$0xff] %v864
        %v867 = vld [vmem:[#allocation2] sm:$0xff]
        %v868 = vld [vmem:[#allocation2 + $0x8] sm:$0xff]
        %v869 = vld [vmem:[#allocation2 + $0x1] sm:$0xff]
        %v870 = vld [vmem:[#allocation2 + $0x9] sm:$0xff]
        %v871 = vld [vmem:[#allocation2 + $0x2] sm:$0xff]
        %v872 = vld [vmem:[#allocation2 + $0xa] sm:$0xff]
        %v873 = vld [vmem:[#allocation2 + $0x3] sm:$0xff]
        %v874 = vld [vmem:[#allocation2 + $0xb] sm:$0xff]
        %v875 = vld [vmem:[#allocation2 + $0x4] sm:$0xff]
        %v876 = vld [vmem:[#allocation2 + $0xc] sm:$0xff]
        %v877 = vld [vmem:[#allocation2 + $0x5] sm:$0xff]
        %v878 = vld [vmem:[#allocation2 + $0xd] sm:$0xff]
        %v879 = vld [vmem:[#allocation2 + $0x6] sm:$0xff]
        %v880 = vld [vmem:[#allocation2 + $0xe] sm:$0xff]
        %v881 = vld [vmem:[%s3] sm:$0xff]
        %v882 = vld [vmem:[%s3 + $0x8] sm:$0xff]
        %v883 = vld [vmem:[%s3 + $0x10] sm:$0xff]
        %v884 = vld [vmem:[%s3 + $0x18] sm:$0xff]
        %v885 = vld [vmem:[%s3 + $0x20] sm:$0xff]
        %v886 = vld [vmem:[%s3 + $0x28] sm:$0xff]
        %v887 = vld [vmem:[%s3 + $0x30] sm:$0xff]
        %v888 = vld [vmem:[%s3 + $0x38] sm:$0xff]
        %v889 = vld [vmem:[%s3 + $0x40] sm:$0xff]
        %v890 = vld [vmem:[%s3 + $0x48] sm:$0xff]
        %v891 = vld [vmem:[%s3 + $0x50] sm:$0xff]
        %v892 = vld [vmem:[%s3 + $0x58] sm:$0xff]
        %v893 = vld [vmem:[%s3 + $0x60] sm:$0xff]
        %v894 = vld [vmem:[%s3 + $0x68] sm:$0xff]
        %v895 = vld [vmem:[%s3 + $0x70] sm:$0xff]
        %v896 = vld [vmem:[%s3 + $0x78] sm:$0xff]
        %v897 = vld [vmem:[%s3 + $0x80] sm:$0xff]
        %v898 = vld [vmem:[%s3 + $0x88] sm:$0xff]
        %v899 = vld [vmem:[%s3 + $0x90] sm:$0xff]
        %v900 = vld [vmem:[%s3 + $0x98] sm:$0xff]
        %v901 = vld [vmem:[%s3 + $0xa0] sm:$0xff]
        %v902 = vld [vmem:[%s3 + $0xa8] sm:$0xff]
        %v903 = vld [vmem:[%s3 + $0xb0] sm:$0xff]
        %v904 = vld [vmem:[%s3 + $0xb8] sm:$0xff]
        %v905 = vld [vmem:[%s3 + $0xc0] sm:$0xff]
        %v906 = vld [vmem:[%s3 + $0xc8] sm:$0xff]
        %v907 = vld [vmem:[%s3 + $0xd0] sm:$0xff]
        %v908 = vld [vmem:[%s3 + $0xd8] sm:$0xff]
        %v909 = vld [vmem:[%s3 + $0xe0] sm:$0xff]
        %v910 = vld [vmem:[%s3 + $0xe8] sm:$0xff]
        %v911 = vld [vmem:[%s3 + $0xf0] sm:$0xff]
        %v912 = vld [vmem:[%s3 + $0xf8] sm:$0xff]
        %v913 = vld [vmem:[%s3 + $0x100] sm:$0xff]
        %v914 = vld [vmem:[%s3 + $0x108] sm:$0xff]
        %v915 = vld [vmem:[%s3 + $0x110] sm:$0xff]
        %v916 = vld [vmem:[%s3 + $0x118] sm:$0xff]
        %v917 = vld [vmem:[%s3 + $0x120] sm:$0xff]
        %v918 = vld [vmem:[%s3 + $0x128] sm:$0xff]
        %v919 = vld [vmem:[%s3 + $0x130] sm:$0xff]
        %v920 = vld [vmem:[%s3 + $0x138] sm:$0xff]
        %v921 = vld [vmem:[%s3 + $0x140] sm:$0xff]
        %v922 = vld [vmem:[%s3 + $0x148] sm:$0xff]
        %v923 = vld [vmem:[%s3 + $0x150] sm:$0xff]
        %v924 = vld [vmem:[%s3 + $0x158] sm:$0xff]
        %v925 = vld [vmem:[%s3 + $0x160] sm:$0xff]
        %v926 = vld [vmem:[%s3 + $0x168] sm:$0xff]
        %v927 = vld [vmem:[%s3 + $0x170] sm:$0xff]
        %v928 = vld [vmem:[%s3 + $0x178] sm:$0xff]
        %v929 = vld [vmem:[%s3 + $0x180] sm:$0xff]
        %v930 = vld [vmem:[%s3 + $0x188] sm:$0xff]
        %v931 = vld [vmem:[%s3 + $0x190] sm:$0xff]
        %v932 = vld [vmem:[%s3 + $0x198] sm:$0xff]
        %v933 = vld [vmem:[%s3 + $0x1a0] sm:$0xff]
        %v934 = vld [vmem:[%s3 + $0x1a8] sm:$0xff]
        %v935 = vld [vmem:[%s3 + $0x1b0] sm:$0xff]
        %v936 = vld [vmem:[%s3 + $0x1b8] sm:$0xff]
        %v937 = vld [vmem:[%s3 + $0x1c0] sm:$0xff]
        %v938 = vld [vmem:[%s3 + $0x1c8] sm:$0xff]
        %v939 = vld [vmem:[%s3 + $0x1d0] sm:$0xff]
        %v940 = vld [vmem:[%s3 + $0x1d8] sm:$0xff]
        %v941 = vld [vmem:[%s3 + $0x1e0] sm:$0xff]
        %v942 = vld [vmem:[%s3 + $0x1e8] sm:$0xff]
        %v943 = vld [vmem:[%s3 + $0x1f0] sm:$0xff]
        %v944 = vld [vmem:[%s3 + $0x1f8] sm:$0xff]
        %v945 = vld [vmem:[%s3 + $0x200] sm:$0xff]
        %v946 = vld [vmem:[%s3 + $0x208] sm:$0xff]
        %v947 = vld [vmem:[%s3 + $0x210] sm:$0xff]
        %v948 = vld [vmem:[%s3 + $0x218] sm:$0xff]
        %v949 = vld [vmem:[%s3 + $0x220] sm:$0xff]
        %v950 = vld [vmem:[%s3 + $0x228] sm:$0xff]
        %v951 = vld [vmem:[%s3 + $0x230] sm:$0xff]
        %v952 = vld [vmem:[%s3 + $0x238] sm:$0xff]
        %v953 = vld [vmem:[%s3 + $0x240] sm:$0xff]
        %v954 = vld [vmem:[%s3 + $0x248] sm:$0xff]
        %v955 = vld [vmem:[%s3 + $0x250] sm:$0xff]
        %v956 = vld [vmem:[%s3 + $0x258] sm:$0xff]
        %v957 = vld [vmem:[%s3 + $0x260] sm:$0xff]
        %v958 = vld [vmem:[%s3 + $0x268] sm:$0xff]
        %v959 = vld [vmem:[%s3 + $0x270] sm:$0xff]
        %v960 = vld [vmem:[%s3 + $0x278] sm:$0xff]
        %v961 = vld [vmem:[%s3 + $0x280] sm:$0xff]
        %v962 = vld [vmem:[%s3 + $0x288] sm:$0xff]
        %v963 = vld [vmem:[%s3 + $0x290] sm:$0xff]
        %v964 = vld [vmem:[%s3 + $0x298] sm:$0xff]
        %v965 = vld [vmem:[%s3 + $0x2a0] sm:$0xff]
        %v966 = vld [vmem:[%s3 + $0x2a8] sm:$0xff]
        %v967 = vld [vmem:[%s3 + $0x2b0] sm:$0xff]
        %v968 = vld [vmem:[%s3 + $0x2b8] sm:$0xff]
        %v969 = vld [vmem:[%s3 + $0x2c0] sm:$0xff]
        %v970 = vld [vmem:[%s3 + $0x2c8] sm:$0xff]
        %v971 = vld [vmem:[%s3 + $0x2d0] sm:$0xff]
        %v972 = vld [vmem:[%s3 + $0x2d8] sm:$0xff]
        %v973 = vld [vmem:[%s3 + $0x2e0] sm:$0xff]
        %v974 = vld [vmem:[%s3 + $0x2e8] sm:$0xff]
        %v975 = vld [vmem:[%s3 + $0x2f0] sm:$0xff]
        %v976 = vld [vmem:[%s3 + $0x2f8] sm:$0xff]
        %v977 = vld [vmem:[%s3 + $0x300] sm:$0xff]
        %v978 = vld [vmem:[%s3 + $0x308] sm:$0xff]
        %v979 = vld [vmem:[%s3 + $0x310] sm:$0xff]
        %v980 = vld [vmem:[%s3 + $0x318] sm:$0xff]
        %v981 = vld [vmem:[%s3 + $0x320] sm:$0xff]
        %v982 = vld [vmem:[%s3 + $0x328] sm:$0xff]
        %v983 = vld [vmem:[%s3 + $0x330] sm:$0xff]
        %v984 = vld [vmem:[%s3 + $0x338] sm:$0xff]
        %v985 = vld [vmem:[%s3 + $0x340] sm:$0xff]
        %v986 = vld [vmem:[%s3 + $0x348] sm:$0xff]
        %v987 = vld [vmem:[%s3 + $0x350] sm:$0xff]
        %v988 = vld [vmem:[%s3 + $0x358] sm:$0xff]
        %v989 = vld [vmem:[%s3 + $0x360] sm:$0xff]
        %v990 = vld [vmem:[%s3 + $0x368] sm:$0xff]
        %v991 = vld [vmem:[%s3 + $0x370] sm:$0xff]
        %v992 = vld [vmem:[%s3 + $0x378] sm:$0xff]
        %993 = vmatprep.subr.mxu0 0.0
        %994 = vmatpush1.msra.mxu0 %v881
        %995 = vmatprep.subr.mxu0 0.0
        %996 = vmatpush1.msra.mxu0 %v882
        %997 = vmatprep.subr.mxu0 0.0
        %998 = vmatpush1.msra.mxu0 %v883
        %999 = vmatprep.subr.mxu0 0.0
        %1000 = vmatpush1.msra.mxu0 %v884
        %1001 = vmatprep.subr.mxu0 0.0
        %1002 = vmatpush1.msra.mxu0 %v885
        %1003 = vmatprep.subr.mxu0 0.0
        %1004 = vmatpush1.msra.mxu0 %v886
        %1005 = vmatprep.subr.mxu0 0.0
        %1006 = vmatpush1.msra.mxu0 %v887
        %1007 = vmatprep.subr.mxu0 0.0
        %1008 = vmatpush1.msra.mxu0 %v888
        %1009 = vmatprep.subr.mxu0 0.0
        %1010 = vmatpush1.msra.mxu0 %v889
        %1011 = vmatprep.subr.mxu0 0.0
        %1012 = vmatpush1.msra.mxu0 %v890
        %1013 = vmatprep.subr.mxu0 0.0
        %1014 = vmatpush1.msra.mxu0 %v891
        %1015 = vmatprep.subr.mxu0 0.0
        %1016 = vmatpush1.msra.mxu0 %v892
        %1017 = vmatprep.subr.mxu0 0.0
        %1018 = vmatpush1.msra.mxu0 %v893
        %1019 = vmatprep.subr.mxu0 0.0
        %1020 = vmatpush1.msra.mxu0 %v894
        %1021 = vmatprep.subr.mxu0 0.0
        %1022 = vmatpush1.msra.mxu0 %v895
        %1023 = vmatprep.subr.mxu0 0.0
        %1024 = vmatpush1.msra.mxu0 %v896
        %1025 = vmatprep.subr.mxu0 0.0
        %1026 = vmatpush1.msra.mxu0 %v897
        %1027 = vmatprep.subr.mxu0 0.0
        %1028 = vmatpush1.msra.mxu0 %v898
        %1029 = vmatprep.subr.mxu0 0.0
        %1030 = vmatpush1.msra.mxu0 %v899
        %1031 = vmatprep.subr.mxu0 0.0
        %1032 = vmatpush1.msra.mxu0 %v900
        %1033 = vmatprep.subr.mxu0 0.0
        %1034 = vmatpush1.msra.mxu0 %v901
        %1035 = vmatprep.subr.mxu0 0.0
        %1036 = vmatpush1.msra.mxu0 %v902
        %1037 = vmatprep.subr.mxu0 0.0
        %1038 = vmatpush1.msra.mxu0 %v903
        %1039 = vmatprep.subr.mxu0 0.0
        %1040 = vmatpush1.msra.mxu0 %v904
        %1041 = vmatprep.subr.mxu0 0.0
        %1042 = vmatpush1.msra.mxu0 %v905
        %1043 = vmatprep.subr.mxu0 0.0
        %1044 = vmatpush1.msra.mxu0 %v906
        %1045 = vmatprep.subr.mxu0 0.0
        %1046 = vmatpush1.msra.mxu0 %v907
        %1047 = vmatprep.subr.mxu0 0.0
        %1048 = vmatpush1.msra.mxu0 %v908
        %1049 = vmatprep.subr.mxu0 0.0
        %1050 = vmatpush1.msra.mxu0 %v909
        %1051 = vmatprep.subr.mxu0 0.0
        %1052 = vmatpush1.msra.mxu0 %v910
        %1053 = vmatprep.subr.mxu0 0.0
        %1054 = vmatpush1.msra.mxu0 %v911
        %1055 = vmatprep.subr.mxu0 0.0
        %1056 = vmatpush1.msra.mxu0 %v912
        %1057 = vmatprep.mubr.f32.mxu0 %v869
        %1058 = vmatmul.mubr.f32.gmra.mrb[0].mxu0 %v867
        %v1059 = vpop.f32.mrb[0].mxu0
        %v1060 = vadd.f32 0.0, %v1059
        %v1061 = vpop.f32.mrb[0].mxu0
        %1062 = vmatprep.mubr.f32.mxu0 %v870
        %1063 = vmatmul.mubr.f32.gmra.mrb[0].mxu0 %v868
        %v1064 = vpop.f32.mrb[0].mxu0
        %v1065 = vadd.f32 0.0, %v1064
        %v1066 = vpop.f32.mrb[0].mxu0
        %1067 = vdwg.mxu0
        %1068 = vmatprep.subr.mxu0 0.0
        %1069 = vmatpush1.msra.mxu0 %v913
        %1070 = vmatprep.subr.mxu0 0.0
        %1071 = vmatpush1.msra.mxu0 %v914
        %1072 = vmatprep.subr.mxu0 0.0
        %1073 = vmatpush1.msra.mxu0 %v915
        %1074 = vmatprep.subr.mxu0 0.0
        %1075 = vmatpush1.msra.mxu0 %v916
        %1076 = vmatprep.subr.mxu0 0.0
        %1077 = vmatpush1.msra.mxu0 %v917
        %1078 = vmatprep.subr.mxu0 0.0
        %1079 = vmatpush1.msra.mxu0 %v918
        %1080 = vmatprep.subr.mxu0 0.0
        %1081 = vmatpush1.msra.mxu0 %v919
        %1082 = vmatprep.subr.mxu0 0.0
        %1083 = vmatpush1.msra.mxu0 %v920
        %1084 = vmatprep.subr.mxu0 0.0
        %1085 = vmatpush1.msra.mxu0 %v921
        %1086 = vmatprep.subr.mxu0 0.0
        %1087 = vmatpush1.msra.mxu0 %v922
        %1088 = vmatprep.subr.mxu0 0.0
        %1089 = vmatpush1.msra.mxu0 %v923
        %1090 = vmatprep.subr.mxu0 0.0
        %1091 = vmatpush1.msra.mxu0 %v924
        %1092 = vmatprep.subr.mxu0 0.0
        %1093 = vmatpush1.msra.mxu0 %v925
        %1094 = vmatprep.subr.mxu0 0.0
        %1095 = vmatpush1.msra.mxu0 %v926
        %1096 = vmatprep.subr.mxu0 0.0
        %1097 = vmatpush1.msra.mxu0 %v927
        %1098 = vmatprep.subr.mxu0 0.0
        %1099 = vmatpush1.msra.mxu0 %v928
        %1100 = vmatprep.subr.mxu0 0.0
        %1101 = vmatpush1.msra.mxu0 %v929
        %1102 = vmatprep.subr.mxu0 0.0
        %1103 = vmatpush1.msra.mxu0 %v930
        %1104 = vmatprep.subr.mxu0 0.0
        %1105 = vmatpush1.msra.mxu0 %v931
        %1106 = vmatprep.subr.mxu0 0.0
        %1107 = vmatpush1.msra.mxu0 %v932
        %1108 = vmatprep.subr.mxu0 0.0
        %1109 = vmatpush1.msra.mxu0 %v933
        %1110 = vmatprep.subr.mxu0 0.0
        %1111 = vmatpush1.msra.mxu0 %v934
        %1112 = vmatprep.subr.mxu0 0.0
        %1113 = vmatpush1.msra.mxu0 %v935
        %1114 = vmatprep.subr.mxu0 0.0
        %1115 = vmatpush1.msra.mxu0 %v936
        %1116 = vmatprep.subr.mxu0 0.0
        %1117 = vmatpush1.msra.mxu0 %v937
        %1118 = vmatprep.subr.mxu0 0.0
        %1119 = vmatpush1.msra.mxu0 %v938
        %1120 = vmatprep.subr.mxu0 0.0
        %1121 = vmatpush1.msra.mxu0 %v939
        %1122 = vmatprep.subr.mxu0 0.0
        %1123 = vmatpush1.msra.mxu0 %v940
        %1124 = vmatprep.subr.mxu0 0.0
        %1125 = vmatpush1.msra.mxu0 %v941
        %1126 = vmatprep.subr.mxu0 0.0
        %1127 = vmatpush1.msra.mxu0 %v942
        %1128 = vmatprep.subr.mxu0 0.0
        %1129 = vmatpush1.msra.mxu0 %v943
        %1130 = vmatprep.subr.mxu0 0.0
        %1131 = vmatpush1.msra.mxu0 %v944
        %1132 = vmatprep.mubr.f32.mxu0 %v873
        %1133 = vmatmul.mubr.f32.gmra.mrb[0].mxu0 %v871
        %v1134 = vpop.f32.mrb[0].mxu0
        %v1135 = vadd.f32 %v1060, %v1134
        %v1136 = vpop.f32.mrb[0].mxu0
        %1137 = vmatprep.mubr.f32.mxu0 %v874
        %1138 = vmatmul.mubr.f32.gmra.mrb[0].mxu0 %v872
        %v1139 = vpop.f32.mrb[0].mxu0
        %v1140 = vadd.f32 %v1065, %v1139
        %v1141 = vpop.f32.mrb[0].mxu0
        %1142 = vdwg.mxu0
        %1143 = vmatprep.subr.mxu0 0.0
        %1144 = vmatpush1.msra.mxu0 %v945
        %1145 = vmatprep.subr.mxu0 0.0
        %1146 = vmatpush1.msra.mxu0 %v946
        %1147 = vmatprep.subr.mxu0 0.0
        %1148 = vmatpush1.msra.mxu0 %v947
        %1149 = vmatprep.subr.mxu0 0.0
        %1150 = vmatpush1.msra.mxu0 %v948
        %1151 = vmatprep.subr.mxu0 0.0
        %1152 = vmatpush1.msra.mxu0 %v949
        %1153 = vmatprep.subr.mxu0 0.0
        %1154 = vmatpush1.msra.mxu0 %v950
        %1155 = vmatprep.subr.mxu0 0.0
        %1156 = vmatpush1.msra.mxu0 %v951
        %1157 = vmatprep.subr.mxu0 0.0
        %1158 = vmatpush1.msra.mxu0 %v952
        %1159 = vmatprep.subr.mxu0 0.0
        %1160 = vmatpush1.msra.mxu0 %v953
        %1161 = vmatprep.subr.mxu0 0.0
        %1162 = vmatpush1.msra.mxu0 %v954
        %1163 = vmatprep.subr.mxu0 0.0
        %1164 = vmatpush1.msra.mxu0 %v955
        %1165 = vmatprep.subr.mxu0 0.0
        %1166 = vmatpush1.msra.mxu0 %v956
        %1167 = vmatprep.subr.mxu0 0.0
        %1168 = vmatpush1.msra.mxu0 %v957
        %1169 = vmatprep.subr.mxu0 0.0
        %1170 = vmatpush1.msra.mxu0 %v958
        %1171 = vmatprep.subr.mxu0 0.0
        %1172 = vmatpush1.msra.mxu0 %v959
        %1173 = vmatprep.subr.mxu0 0.0
        %1174 = vmatpush1.msra.mxu0 %v960
        %1175 = vmatprep.subr.mxu0 0.0
        %1176 = vmatpush1.msra.mxu0 %v961
        %1177 = vmatprep.subr.mxu0 0.0
        %1178 = vmatpush1.msra.mxu0 %v962
        %1179 = vmatprep.subr.mxu0 0.0
        %1180 = vmatpush1.msra.mxu0 %v963
        %1181 = vmatprep.subr.mxu0 0.0
        %1182 = vmatpush1.msra.mxu0 %v964
        %1183 = vmatprep.subr.mxu0 0.0
        %1184 = vmatpush1.msra.mxu0 %v965
        %1185 = vmatprep.subr.mxu0 0.0
        %1186 = vmatpush1.msra.mxu0 %v966
        %1187 = vmatprep.subr.mxu0 0.0
        %1188 = vmatpush1.msra.mxu0 %v967
        %1189 = vmatprep.subr.mxu0 0.0
        %1190 = vmatpush1.msra.mxu0 %v968
        %1191 = vmatprep.subr.mxu0 0.0
        %1192 = vmatpush1.msra.mxu0 %v969
        %1193 = vmatprep.subr.mxu0 0.0
        %1194 = vmatpush1.msra.mxu0 %v970
        %1195 = vmatprep.subr.mxu0 0.0
        %1196 = vmatpush1.msra.mxu0 %v971
        %1197 = vmatprep.subr.mxu0 0.0
        %1198 = vmatpush1.msra.mxu0 %v972
        %1199 = vmatprep.subr.mxu0 0.0
        %1200 = vmatpush1.msra.mxu0 %v973
        %1201 = vmatprep.subr.mxu0 0.0
        %1202 = vmatpush1.msra.mxu0 %v974
        %1203 = vmatprep.subr.mxu0 0.0
        %1204 = vmatpush1.msra.mxu0 %v975
        %1205 = vmatprep.subr.mxu0 0.0
        %1206 = vmatpush1.msra.mxu0 %v976
        %1207 = vmatprep.mubr.f32.mxu0 %v877
        %1208 = vmatmul.mubr.f32.gmra.mrb[0].mxu0 %v875
        %v1209 = vpop.f32.mrb[0].mxu0
        %v1210 = vadd.f32 %v1135, %v1209
        %v1211 = vpop.f32.mrb[0].mxu0
        %1212 = vmatprep.mubr.f32.mxu0 %v878
        %1213 = vmatmul.mubr.f32.gmra.mrb[0].mxu0 %v876
        %v1214 = vpop.f32.mrb[0].mxu0
        %v1215 = vadd.f32 %v1140, %v1214
        %v1216 = vpop.f32.mrb[0].mxu0
        %1217 = vdwg.mxu0
        %1218 = vmatprep.subr.mxu0 0.0
        %1219 = vmatpush1.msra.mxu0 %v977
        %1220 = vmatprep.subr.mxu0 0.0
        %1221 = vmatpush1.msra.mxu0 %v978
        %1222 = vmatprep.subr.mxu0 0.0
        %1223 = vmatpush1.msra.mxu0 %v979
        %1224 = vmatprep.subr.mxu0 0.0
        %1225 = vmatpush1.msra.mxu0 %v980
        %1226 = vmatprep.subr.mxu0 0.0
        %1227 = vmatpush1.msra.mxu0 %v981
        %1228 = vmatprep.subr.mxu0 0.0
        %1229 = vmatpush1.msra.mxu0 %v982
        %1230 = vmatprep.subr.mxu0 0.0
        %1231 = vmatpush1.msra.mxu0 %v983
        %1232 = vmatprep.subr.mxu0 0.0
        %1233 = vmatpush1.msra.mxu0 %v984
        %1234 = vmatprep.subr.mxu0 0.0
        %1235 = vmatpush1.msra.mxu0 %v985
        %1236 = vmatprep.subr.mxu0 0.0
        %1237 = vmatpush1.msra.mxu0 %v986
        %1238 = vmatprep.subr.mxu0 0.0
        %1239 = vmatpush1.msra.mxu0 %v987
        %1240 = vmatprep.subr.mxu0 0.0
        %1241 = vmatpush1.msra.mxu0 %v988
        %1242 = vmatprep.subr.mxu0 0.0
        %1243 = vmatpush1.msra.mxu0 %v989
        %1244 = vmatprep.subr.mxu0 0.0
        %1245 = vmatpush1.msra.mxu0 %v990
        %1246 = vmatprep.subr.mxu0 0.0
        %1247 = vmatpush1.msra.mxu0 %v991
        %1248 = vmatprep.subr.mxu0 0.0
        %1249 = vmatpush1.msra.mxu0 %v992
        %1250 = vmatprep.subr.mxu0 0.0
        %1251 = vmatpush1.msra.mxu0 0.0
        %1252 = vmatprep.subr.mxu0 0.0
        %1253 = vmatpush1.msra.mxu0 0.0
        %1254 = vmatprep.subr.mxu0 0.0
        %1255 = vmatpush1.msra.mxu0 0.0
        %1256 = vmatprep.subr.mxu0 0.0
        %1257 = vmatpush1.msra.mxu0 0.0
        %1258 = vmatprep.subr.mxu0 0.0
        %1259 = vmatpush1.msra.mxu0 0.0
        %1260 = vmatprep.subr.mxu0 0.0
        %1261 = vmatpush1.msra.mxu0 0.0
        %1262 = vmatprep.subr.mxu0 0.0
        %1263 = vmatpush1.msra.mxu0 0.0
        %1264 = vmatprep.subr.mxu0 0.0
        %1265 = vmatpush1.msra.mxu0 0.0
        %1266 = vmatprep.subr.mxu0 0.0
        %1267 = vmatpush1.msra.mxu0 0.0
        %1268 = vmatprep.subr.mxu0 0.0
        %1269 = vmatpush1.msra.mxu0 0.0
        %1270 = vmatprep.subr.mxu0 0.0
        %1271 = vmatpush1.msra.mxu0 0.0
        %1272 = vmatprep.subr.mxu0 0.0
        %1273 = vmatpush1.msra.mxu0 0.0
        %1274 = vmatprep.subr.mxu0 0.0
        %1275 = vmatpush1.msra.mxu0 0.0
        %1276 = vmatprep.subr.mxu0 0.0
        %1277 = vmatpush1.msra.mxu0 0.0
        %1278 = vmatprep.subr.mxu0 0.0
        %1279 = vmatpush1.msra.mxu0 0.0
        %1280 = vmatprep.subr.mxu0 0.0
        %1281 = vmatpush1.msra.mxu0 0.0
        %1282 = vmatprep.mubr.f32.mxu0 0.0
        %1283 = vmatmul.mubr.f32.gmra.mrb[0].mxu0 %v879
        %v1284 = vpop.f32.mrb[0].mxu0
        %v1285 = vadd.f32 %v1210, %v1284
        %v1286 = vpop.f32.mrb[0].mxu0
        %1287 = vmatprep.mubr.f32.mxu0 0.0
        %1288 = vmatmul.mubr.f32.gmra.mrb[0].mxu0 %v880
        %v1289 = vpop.f32.mrb[0].mxu0
        %v1290 = vadd.f32 %v1215, %v1289
        %v1291 = vpop.f32.mrb[0].mxu0
        %1292 = vdwg.mxu0
        %s1293 = sld [smem:[#allocation3]]
        %v1294 = vstv %s1293
        %v1295 = vadd.f32 %v1285, %v1294
        %v1296 = vadd.f32 %v1290, %v1294
        %v1297 = vxor.u32 %v1295, 2147483648
        %v1298 = vxor.u32 %v1296, 2147483648
        %v1299 = vmul.f32 %v1297, 1.442695
        %v1300 = vpow.pop %v1299
        %v1301 = vmul.f32 %v1298, 1.442695
        %v1302 = vpow.pop %v1301
        %v1303 = vadd.f32 %v1300, 1.0
        %v1304 = vadd.f32 %v1302, 1.0
        %v1305 = vrcp.pop %v1303
        %v1306 = vmul.f32 1.0, %v1305
        %v1307 = vrcp.pop %v1304
        %v1308 = vmul.f32 1.0, %v1307
        %v1309 = vcombine.high %v1306, 0.0
        %v1311 = vunpack.c.l.s4 1983009808
        %v1312 = vunpack.c.0.s8 %v1311
        %v1313 = vlaneseq
        %v1314 = vshrl.u32 %v1313, 7
        %v1315 = vsub.s32 %v1312, %v1314
        %v1316 = vrot.slane %v1306, %v1315
        %v1318 = vunpack.c.l.s4 1983009808
        %v1319 = vunpack.c.0.s8 %v1318
        %v1320 = vlaneseq
        %v1321 = vshrl.u32 %v1320, 7
        %v1322 = vsub.s32 %v1319, %v1321
        %v1323 = vrot.slane %v1309, %v1322
        %v1324 = vcombine.high %v1316, 0.0
        %v1326 = vunpack.c.l.s4 1934713408
        %v1327 = vunpack.c.0.s8 %v1326
        %v1328 = vlaneseq
        %v1329 = vshrl.u32 %v1328, 7
        %v1330 = vsub.s32 %v1327, %v1329
        %v1331 = vrot.slane %v1316, %v1330
        %v1333 = vunpack.c.l.s4 1934713408
        %v1334 = vunpack.c.0.s8 %v1333
        %v1335 = vlaneseq
        %v1336 = vshrl.u32 %v1335, 7
        %v1337 = vsub.s32 %v1334, %v1336
        %v1338 = vrot.slane %v1324, %v1337
        %v1339 = vcombine.high %v1323, 0.0
        %v1341 = vunpack.c.l.s4 1934713408
        %v1342 = vunpack.c.0.s8 %v1341
        %v1343 = vlaneseq
        %v1344 = vshrl.u32 %v1343, 7
        %v1345 = vsub.s32 %v1342, %v1344
        %v1346 = vrot.slane %v1323, %v1345
        %v1348 = vunpack.c.l.s4 1934713408
        %v1349 = vunpack.c.0.s8 %v1348
        %v1350 = vlaneseq
        %v1351 = vshrl.u32 %v1350, 7
        %v1352 = vsub.s32 %v1349, %v1351
        %v1353 = vrot.slane %v1339, %v1352
        %v1354 = vcombine.high %v1331, 0.0
        %v1355 = vcombine.high %v1338, 0.0
        %v1356 = vcombine.high %v1346, 0.0
        %v1357 = vcombine.high %v1353, 0.0
        %v1358 = vcombine.high %v1308, 0.0
        %v1360 = vunpack.c.l.s4 1983009808
        %v1361 = vunpack.c.0.s8 %v1360
        %v1362 = vlaneseq
        %v1363 = vshrl.u32 %v1362, 7
        %v1364 = vsub.s32 %v1361, %v1363
        %v1365 = vrot.slane %v1308, %v1364
        %v1367 = vunpack.c.l.s4 1983009808
        %v1368 = vunpack.c.0.s8 %v1367
        %v1369 = vlaneseq
        %v1370 = vshrl.u32 %v1369, 7
        %v1371 = vsub.s32 %v1368, %v1370
        %v1372 = vrot.slane %v1358, %v1371
        %v1373 = vcombine.high %v1365, 0.0
        %v1375 = vunpack.c.l.s4 1934713408
        %v1376 = vunpack.c.0.s8 %v1375
        %v1377 = vlaneseq
        %v1378 = vshrl.u32 %v1377, 7
        %v1379 = vsub.s32 %v1376, %v1378
        %v1380 = vrot.slane %v1365, %v1379
        %v1382 = vunpack.c.l.s4 1934713408
        %v1383 = vunpack.c.0.s8 %v1382
        %v1384 = vlaneseq
        %v1385 = vshrl.u32 %v1384, 7
        %v1386 = vsub.s32 %v1383, %v1385
        %v1387 = vrot.slane %v1373, %v1386
        %v1388 = vcombine.high %v1372, 0.0
        %v1390 = vunpack.c.l.s4 1934713408
        %v1391 = vunpack.c.0.s8 %v1390
        %v1392 = vlaneseq
        %v1393 = vshrl.u32 %v1392, 7
        %v1394 = vsub.s32 %v1391, %v1393
        %v1395 = vrot.slane %v1372, %v1394
        %v1397 = vunpack.c.l.s4 1934713408
        %v1398 = vunpack.c.0.s8 %v1397
        %v1399 = vlaneseq
        %v1400 = vshrl.u32 %v1399, 7
        %v1401 = vsub.s32 %v1398, %v1400
        %v1402 = vrot.slane %v1388, %v1401
        %v1403 = vcombine.high %v1380, 0.0
        %v1404 = vcombine.high %v1387, 0.0
        %v1405 = vcombine.high %v1395, 0.0
        %v1406 = vcombine.high %v1402, 0.0
        %1408 = vrot.lane.b32.xlu0 %v1354, 16
        %v1409 = vpop.permute.xlu0 %1408
        %1412 = vrot.lane.b32.xlu0 %v1338, 32
        %v1413 = vpop.permute.xlu0 %1412
        %1416 = vrot.lane.b32.xlu0 %v1355, 48
        %v1417 = vpop.permute.xlu0 %1416
        %1420 = vrot.lane.b32.xlu0 %v1346, 64
        %v1421 = vpop.permute.xlu0 %1420
        %1424 = vrot.lane.b32.xlu0 %v1356, 80
        %v1425 = vpop.permute.xlu0 %1424
        %1428 = vrot.lane.b32.xlu0 %v1353, 96
        %v1429 = vpop.permute.xlu0 %1428
        %1432 = vrot.lane.b32.xlu0 %v1357, 112
        %v1433 = vpop.permute.xlu0 %1432
        %1436 = vrot.lane.b32.xlu0 %v1403, 16
        %v1437 = vpop.permute.xlu0 %1436
        %1440 = vrot.lane.b32.xlu0 %v1387, 32
        %v1441 = vpop.permute.xlu0 %1440
        %1444 = vrot.lane.b32.xlu0 %v1404, 48
        %v1445 = vpop.permute.xlu0 %1444
        %1448 = vrot.lane.b32.xlu0 %v1395, 64
        %v1449 = vpop.permute.xlu0 %1448
        %1452 = vrot.lane.b32.xlu0 %v1405, 80
        %v1453 = vpop.permute.xlu0 %1452
        %1456 = vrot.lane.b32.xlu0 %v1402, 96
        %v1457 = vpop.permute.xlu0 %1456
        %1460 = vrot.lane.b32.xlu0 %v1406, 112
        %v1461 = vpop.permute.xlu0 %1460
        %v1463 = vsel %vm860, %v1331, %v1409
        %v1464 = vsel %vm322, %v1463, %v1413
        %vm1465 = vcmask 392192
        %v1466 = vsel %vm1465, %v1464, %v1417
        %vm1467 = vcmask 523264
        %v1468 = vsel %vm1467, %v1466, %v1421
        %vm1469 = vcmask 654336
        %v1470 = vsel %vm1469, %v1468, %v1425
        %vm1471 = vcmask 785408
        %v1472 = vsel %vm1471, %v1470, %v1429
        %vm1473 = vcmask 916480
        %v1474 = vsel %vm1473, %v1472, %v1433
        %v1475 = vsel %vm860, %v1380, %v1437
        %v1476 = vsel %vm322, %v1475, %v1441
        %v1477 = vsel %vm1465, %v1476, %v1445
        %v1478 = vsel %vm1467, %v1477, %v1449
        %v1479 = vsel %vm1469, %v1478, %v1453
        %v1480 = vsel %vm1471, %v1479, %v1457
        %v1481 = vsel %vm1473, %v1480, %v1461
        %v1482 = vld [vmem:[%s218] sm:$0xff]
        %v1483 = vld [vmem:[%s218 + $0x8] sm:$0xff]
        %v1484 = vld [vmem:[%s218 + $0x10] sm:$0xff]
        %v1485 = vld [vmem:[%s218 + $0x18] sm:$0xff]
        %v1486 = vld [vmem:[%s218 + $0x20] sm:$0xff]
        %v1487 = vld [vmem:[%s218 + $0x28] sm:$0xff]
        %v1488 = vld [vmem:[%s218 + $0x30] sm:$0xff]
        %v1489 = vld [vmem:[%s218 + $0x38] sm:$0xff]
        %v1490 = vlaneseq
        %v1491 = vshrl.u32 %v1490, 7
        %v1492 = vsub.s32 0, %v1491
        %v1493 = vrot.slane %v1474, %v1492
        %v1494 = vlaneseq
        %v1495 = vshrl.u32 %v1494, 7
        %v1496 = vsub.s32 0, %v1495
        %v1497 = vrot.slane %v1481, %v1496
        %v1498 = vmul.f32 %v1482, %v1493
        %v1499 = vmul.f32 %v1483, %v1497
        %v1500 = vmul.f32 %v1484, %v1493
        %v1501 = vmul.f32 %v1485, %v1497
        %v1502 = vmul.f32 %v1486, %v1493
        %v1503 = vmul.f32 %v1487, %v1497
        %v1504 = vmul.f32 %v1488, %v1493
        %v1505 = vmul.f32 %v1489, %v1497
        %1506 = vst [vmem:[%s218] sm:$0xff] %v1498
        %1507 = vst [vmem:[%s218 + $0x8] sm:$0xff] %v1499
        %1508 = vst [vmem:[%s218 + $0x10] sm:$0xff] %v1500
        %1509 = vst [vmem:[%s218 + $0x18] sm:$0xff] %v1501
        %1510 = vst [vmem:[%s218 + $0x20] sm:$0xff] %v1502
        %1511 = vst [vmem:[%s218 + $0x28] sm:$0xff] %v1503
        %1512 = vst [vmem:[%s218 + $0x30] sm:$0xff] %v1504
        %1513 = vst [vmem:[%s218 + $0x38] sm:$0xff] %v1505
        %s1514 = sand.u32 %s138, 1
        %s1515 = scalar_lea.sflag [#allocation5], %s1514
        %s1516 = sand.u32 %s138, 1
        %s1517 = smul.addr %s1516, 64
        %s1518 = scalar_lea.vmem [#allocation4], %s1517
        // Predicated region
        $region41: #{tpu_custom_call.1} parent=39 // pred_check
          %p1519 = pneg %p148
        $region42: #{tpu_custom_call.1} parent=39 // pred_check_branch
          %1521 = sbr.rel (%p1519) target = $region44
        $region43: #{tpu_custom_call.1} parent=39 // pred_region
          %s1523 = ssub.s32 1024, 1024
          %1524 = vsyncadd %s1515, %s1523
          %s1525 = smul.addr %s20, 8
          %s1526 = smul.addr %s1525, 128
          %s1527 = scalar_lea.hbm %s5, %s1526
          %s1528 = sshll.u32 %s1518, 4
          %s1529 = int_to_ptr.vmem [resolvable:$true] %s1528
          %1534 = dma.vmem_to_hbm [thread:$0]  %s1529, 1024, %s1527, %s1515, 256, 256, 16
        $region44: #{tpu_custom_call.1} parent=39 // pred_fallthru
          _
      $region40: #{tpu_custom_call.1} parent=5 // pred_fallthru
        _
      %p1535 = scmp.le.s32.totalorder 2, %s15
      // Predicated region
      $region45: #{tpu_custom_call.1} parent=5 // pred_check
        %p1536 = pneg %p1535
      $region46: #{tpu_custom_call.1} parent=5 // pred_check_branch
        %1538 = sbr.rel (%p1536) target = $region48
      $region47: #{tpu_custom_call.1} parent=5 // pred_region
        %s1539 = ssub.s32 %s15, 2
        // Predicated region
        $region49: #{tpu_custom_call.1} parent=47 // pred_check
          %p1540 = pneg %p154
        $region50: #{tpu_custom_call.1} parent=47 // pred_check_branch
          %1542 = sbr.rel (%p1540) target = $region52
        $region51: #{tpu_custom_call.1} parent=47 // pred_region
          %s1543 = sand.u32 %s139, 1
          %s1544 = scalar_lea.sflag [#allocation5], %s1543
          %s1545 = sand.u32 %s139, 1
          %s1546 = smul.addr %s1545, 64
          %s1547 = scalar_lea.vmem [#allocation4], %s1546
          %1548 = dma.done %s1544, 1024
        $region52: #{tpu_custom_call.1} parent=47 // pred_fallthru
          _
      $region48: #{tpu_custom_call.1} parent=5 // pred_fallthru
        _
    $region6: #{tpu_custom_call.1} parent=1 // loop_footer
      %s19 = sadd.s32 1, %s15
    $region7: #{tpu_custom_call.1} parent=1 // loop_footer_branch
      %14 = sbr.rel target = $region3
    $region8: #{tpu_custom_call.1} parent=1 // loop_exit
      _
    %1549 = vsyncpa [#allocation5], 1
    %s1550 = scalar_lea.sflag [#allocation5], 1
    %1551 = vsyncpa %s1550, 1

</llo_original>
